<compile_context>
chip_gen: v6e
topology: v6e:2x2x1
jax: 0.10.0
libtpu: 0.0.40
codegen_flags: <defaults>
</compile_context>

<pallas_src>
import jax
import jax.numpy as jnp
from jax.experimental import pallas as pl
from jax.experimental.pallas import tpu as pltpu

F_RAW = 1000   # feature count fixed by the module contract (sub_model -> 1000)
F_PAD = 1024   # lane-padded feature dim used inside the kernel


def _round_up(n, m):
    return (n + m - 1) // m * m


def _fused_kernel(x_ref, rigs_ref, w1_ref, b1_ref, w2f_ref, w2r_ref, b2_ref,
                  out_ref, acc_ref):
    """grid = (batch tiles, D reduction tiles).

    x_ref    : [tb, tk]      bf16  flattened image slice
    rigs_ref : [tb, 1]       f32   extra modality scalar per sample
    w1_ref   : [tk, F_PAD]   bf16  backbone weight slice (pre-transposed)
    b1_ref   : [1, F_PAD]    f32   backbone bias (padded)
    w2f_ref  : [F_PAD, NCP]  f32   fc weight acting on features (padded)
    w2r_ref  : [1, NCP]      f32   fc weight acting on rigs (padded)
    b2_ref   : [1, NCP]      f32   fc bias (padded)
    out_ref  : [tb, NCP]     f32
    acc_ref  : [tb, F_PAD]   f32   feature accumulator scratch
    """
    k = pl.program_id(1)

    @pl.when(k == 0)
    def _():
        acc_ref[...] = jnp.zeros_like(acc_ref)

    # forward_features partial sum: acc += x_tile @ W1_tile  (bf16 in, f32 acc)
    acc_ref[...] += jnp.dot(x_ref[...], w1_ref[...],
                            preferred_element_type=jnp.float32)

    @pl.when(k == pl.num_programs(1) - 1)
    def _():
        feats = acc_ref[...] + b1_ref[...]                      # [tb, F_PAD] f32
        # fc over cat([f, rigs]) folded:  f @ W2f + rigs * w2r + b2
        out = jnp.dot(feats, w2f_ref[...],
                      preferred_element_type=jnp.float32)       # [tb, NCP]
        out = out + rigs_ref[...] * w2r_ref[...] + b2_ref[...]  # f32 epilogue
        out_ref[...] = out.astype(out_ref.dtype)


def init_params(key, in_dim, num_classes):
    """Raw PyTorch-layout parameters (backbone Linear(D,1000), fc Linear(1001,NC))."""
    k1, k2, k3, k4 = jax.random.split(key, 4)
    w1 = jax.random.normal(k1, (F_RAW, in_dim), jnp.float32) * 0.02
    b1 = jax.random.normal(k2, (F_RAW,), jnp.float32) * 0.02
    w2 = jax.random.normal(k3, (num_classes, F_RAW + 1), jnp.float32) * 0.02
    b2 = jax.random.normal(k4, (num_classes,), jnp.float32) * 0.02
    return {"w1": w1, "b1": b1, "w2": w2, "b2": b2}


def prepare_params(raw, *, tk=512):
    """One-time layout transform: transpose, split, pad, cast the big weight to bf16."""
    w1, b1, w2, b2 = raw["w1"], raw["b1"], raw["w2"], raw["b2"]
    nc = w2.shape[0]
    D = w1.shape[1]
    ncp = _round_up(max(nc, 128), 128)

    # Choose the reduction tile so it divides the padded D.
    if D > tk:
        Dp = _round_up(D, tk)
        tk_eff = tk
    else:
        Dp = _round_up(D, 128)
        tk_eff = Dp

    # Backbone weight: [1000, D] -> zero-padded [Dp, 1024], bf16 (streamed operand).
    w1_t = jnp.zeros((Dp, F_PAD), jnp.float32).at[:D, :F_RAW].set(w1.T)
    w1_t = w1_t.astype(jnp.bfloat16)
    b1_p = jnp.zeros((1, F_PAD), jnp.float32).at[:, :F_RAW].set(b1)

    # fc weight split:  cat([f, rigs]) @ W2.T == f @ W2[:, :1000].T + rigs @ W2[:, 1000:].T
    w2f = jnp.zeros((F_PAD, ncp), jnp.float32).at[:F_RAW, :nc].set(w2[:, :F_RAW].T)
    w2r = jnp.zeros((1, ncp), jnp.float32).at[:, :nc].set(w2[:, F_RAW:].T)
    b2_p = jnp.zeros((1, ncp), jnp.float32).at[:, :nc].set(b2)

    return {"w1_t": w1_t, "b1": b1_p, "w2f": w2f, "w2r": w2r, "b2": b2_p,
            "nc": nc, "ncp": ncp, "D": D, "Dp": Dp, "tk": tk_eff}


def mohs_modals_forward(x, rigs, params):
    """x: [B, C, H, W] f32 (NCHW), rigs: [B, 1] f32 -> [B, num_classes] f32."""
    B = x.shape[0]
    x_flat = x.reshape(B, -1)                         # torch.flatten(x, 1)
    D, Dp, tk = params["D"], params["Dp"], params["tk"]
    nc, ncp = params["nc"], params["ncp"]
    assert x_flat.shape[1] == D

    # Pad batch to the f32 sublane tile (8); tile by 128 once large enough.
    Bp = _round_up(B, 8)
    if Bp >= 128:
        Bp = _round_up(Bp, 128)
        tb = 128
    else:
        tb = Bp

    # Zero-padding contributes nothing to the matmuls; sliced off afterwards.
    x_p = jnp.zeros((Bp, Dp), jnp.bfloat16).at[:B, :D].set(
        x_flat.astype(jnp.bfloat16))
    rigs_p = jnp.zeros((Bp, 1), jnp.float32).at[:B, :].set(
        rigs.astype(jnp.float32))

    grid = (Bp // tb, Dp // tk)

    flops = 2 * Bp * (Dp * F_PAD + F_PAD * ncp)
    bytes_accessed = (x_p.size * 2 + params["w1_t"].size * 2
                      + params["w2f"].size * 4 + Bp * ncp * 4)

    out = pl.pallas_call(
        _fused_kernel,
        out_shape=jax.ShapeDtypeStruct((Bp, ncp), jnp.float32),
        grid_spec=pltpu.PrefetchScalarGridSpec(
            num_scalar_prefetch=0,
            grid=grid,
            in_specs=[
                pl.BlockSpec((tb, tk), lambda i, k: (i, k)),      # x slice
                pl.BlockSpec((tb, 1), lambda i, k: (i, 0)),       # rigs
                pl.BlockSpec((tk, F_PAD), lambda i, k: (k, 0)),   # w1 slice (streamed)
                pl.BlockSpec((1, F_PAD), lambda i, k: (0, 0)),    # b1
                pl.BlockSpec((F_PAD, ncp), lambda i, k: (0, 0)),  # w2f
                pl.BlockSpec((1, ncp), lambda i, k: (0, 0)),      # w2r
                pl.BlockSpec((1, ncp), lambda i, k: (0, 0)),      # b2
            ],
            out_specs=pl.BlockSpec((tb, ncp), lambda i, k: (i, 0)),
            scratch_shapes=[pltpu.VMEM((tb, F_PAD), jnp.float32)],
        ),
        compiler_params=pltpu.CompilerParams(
            dimension_semantics=("parallel", "arbitrary")),
        cost_estimate=pl.CostEstimate(flops=flops, transcendentals=0,
                                      bytes_accessed=bytes_accessed),
    )(x_p, rigs_p, params["w1_t"], params["b1"], params["w2f"],
      params["w2r"], params["b2"])

    return out[:B, :nc]


def _reference(x, rigs, raw):
    """Pure-JAX f32 reference matching the PyTorch module semantics."""
    B = x.shape[0]
    xf = x.reshape(B, -1)
    f = xf @ raw["w1"].T + raw["b1"]
    cat = jnp.concatenate([f, rigs], axis=1)
    return cat @ raw["w2"].T + raw["b2"]


if __name__ == "__main__":
    key = jax.random.PRNGKey(0)
    kx, kr, kp = jax.random.split(key, 3)

    B, C, H, W = 2, 4, 16, 16
    num_classes = 10

    x = jax.random.normal(kx, (B, C, H, W), jnp.float32)
    rigs = jax.random.normal(kr, (B, 1), jnp.float32)

    raw_params = init_params(kp, C * H * W, num_classes)
    params = prepare_params(raw_params)     # one-time layout transform

    y = mohs_modals_forward(x, rigs, params)
    y = jax.block_until_ready(y)

    y_ref = _reference(x, rigs, raw_params)
    assert y.shape == (B, num_classes)
    # bf16 weights/activations in the first matmul -> loosened tolerance.
    assert jnp.allclose(y, y_ref, atol=2e-2, rtol=2e-2), (
        f"mismatch vs reference, max abs err = {jnp.max(jnp.abs(y - y_ref))}")
    print("KERNEL_OK")
</pallas_src>

<mosaic_0001>
module attributes {stable_mosaic.version = 11 : i64} {
  func.func @_fused_kernel(%arg0: i32, %arg1: i32, %arg2: memref<8x512xbf16, #tpu.memory_space<vmem>>, %arg3: memref<8x1xf32, #tpu.memory_space<vmem>>, %arg4: memref<512x1024xbf16, #tpu.memory_space<vmem>>, %arg5: memref<1x1024xf32, #tpu.memory_space<vmem>>, %arg6: memref<1024x128xf32, #tpu.memory_space<vmem>>, %arg7: memref<1x128xf32, #tpu.memory_space<vmem>>, %arg8: memref<1x128xf32, #tpu.memory_space<vmem>>, %arg9: memref<8x128xf32, #tpu.memory_space<vmem>>, %arg10: memref<8x1024xf32, #tpu.memory_space<vmem>>) attributes {dimension_semantics = [#tpu.dimension_semantics<parallel>, #tpu.dimension_semantics<arbitrary>], iteration_bounds = array<i64: 1, 2>, scalar_prefetch = 0 : i64, scratch_operands = 1 : i64, tpu.core_type = #tpu.core_type<tc>, window_params = [{transform_indices = @transform_0, window_bounds = array<i64: 8, 512>}, {transform_indices = @transform_1, window_bounds = array<i64: 8, 1>}, {transform_indices = @transform_2, window_bounds = array<i64: 512, 1024>}, {pipeline_mode = #tpu.pipeline_mode<synchronous>, transform_indices = @transform_3, window_bounds = array<i64: 1, 1024>}, {pipeline_mode = #tpu.pipeline_mode<synchronous>, transform_indices = @transform_4, window_bounds = array<i64: 1024, 128>}, {pipeline_mode = #tpu.pipeline_mode<synchronous>, transform_indices = @transform_5, window_bounds = array<i64: 1, 128>}, {pipeline_mode = #tpu.pipeline_mode<synchronous>, transform_indices = @transform_6, window_bounds = array<i64: 1, 128>}, {transform_indices = @transform_7, window_bounds = array<i64: 8, 128>}]} {
    %c0_i32 = arith.constant 0 : i32
    %0 = arith.cmpi eq, %arg1, %c0_i32 : i32
    %1 = arith.extui %0 : i1 to i32
    %c0_i32_0 = arith.constant 0 : i32
    %2 = arith.cmpi ne, %1, %c0_i32_0 : i32
    scf.if %2 {
      %cst_9 = arith.constant 0.000000e+00 : f32
      %12 = vector.broadcast %cst_9 : f32 to vector<8x1024xf32>
      %c0_10 = arith.constant 0 : index
      %c0_11 = arith.constant 0 : index
      %13 = vector.load %arg10[%c0_10, %c0_11] : memref<8x1024xf32, #tpu.memory_space<vmem>>, vector<8x1024xf32>
      tpu.vector_store %arg10[%c0_10, %c0_11], %12 {strides = array<i32>} : memref<8x1024xf32, #tpu.memory_space<vmem>>, vector<8x1024xf32>,
    } else {
    }
    %c0 = arith.constant 0 : index
    %c0_1 = arith.constant 0 : index
    %3 = vector.load %arg10[%c0, %c0_1] : memref<8x1024xf32, #tpu.memory_space<vmem>>, vector<8x1024xf32>
    %c0_2 = arith.constant 0 : index
    %c0_3 = arith.constant 0 : index
    %4 = vector.load %arg2[%c0_2, %c0_3] : memref<8x512xbf16, #tpu.memory_space<vmem>>, vector<8x512xbf16>
    %c0_4 = arith.constant 0 : index
    %c0_5 = arith.constant 0 : index
    %5 = vector.load %arg4[%c0_4, %c0_5] : memref<512x1024xbf16, #tpu.memory_space<vmem>>, vector<512x1024xbf16>
    %cst = arith.constant dense<0.000000e+00> : vector<8x1024xf32>
    %6 = tpu.matmul %4, %5, %cst {dimension_numbers = #tpu.dot_dimension_numbers<[1], [0], [0], [1], [0, 0, 1, 1], [], []>} : vector<8x512xbf16>, vector<512x1024xbf16>, vector<8x1024xf32> -> vector<8x1024xf32>
    %7 = arith.addf %3, %6 : vector<8x1024xf32>
    %c0_6 = arith.constant 0 : index
    %c0_7 = arith.constant 0 : index
    %8 = vector.load %arg10[%c0_6, %c0_7] : memref<8x1024xf32, #tpu.memory_space<vmem>>, vector<8x1024xf32>
    tpu.vector_store %arg10[%c0_6, %c0_7], %7 {strides = array<i32>} : memref<8x1024xf32, #tpu.memory_space<vmem>>, vector<8x1024xf32>,
    %c1_i32 = arith.constant 1 : i32
    %9 = arith.cmpi eq, %arg1, %c1_i32 : i32
    %10 = arith.extui %9 : i1 to i32
    %c0_i32_8 = arith.constant 0 : i32
    %11 = arith.cmpi ne, %10, %c0_i32_8 : i32
    scf.if %11 {
      %c0_9 = arith.constant 0 : index
      %c0_10 = arith.constant 0 : index
      %12 = vector.load %arg10[%c0_9, %c0_10] : memref<8x1024xf32, #tpu.memory_space<vmem>>, vector<8x1024xf32>
      %c0_11 = arith.constant 0 : index
      %c0_12 = arith.constant 0 : index
      %13 = vector.load %arg5[%c0_11, %c0_12] : memref<1x1024xf32, #tpu.memory_space<vmem>>, vector<1x1024xf32>
      %14 = vector.broadcast %13 : vector<1x1024xf32> to vector<8x1024xf32>
      %15 = arith.addf %12, %14 : vector<8x1024xf32>
      %c0_13 = arith.constant 0 : index
      %c0_14 = arith.constant 0 : index
      %16 = vector.load %arg6[%c0_13, %c0_14] : memref<1024x128xf32, #tpu.memory_space<vmem>>, vector<1024x128xf32>
      %cst_15 = arith.constant dense<0.000000e+00> : vector<8x128xf32>
      %17 = tpu.matmul %15, %16, %cst_15 {dimension_numbers = #tpu.dot_dimension_numbers<[1], [0], [0], [1], [0, 0, 1, 1], [], []>} : vector<8x1024xf32>, vector<1024x128xf32>, vector<8x128xf32> -> vector<8x128xf32>
      %c0_16 = arith.constant 0 : index
      %c0_17 = arith.constant 0 : index
      %18 = vector.load %arg3[%c0_16, %c0_17] : memref<8x1xf32, #tpu.memory_space<vmem>>, vector<8x1xf32>
      %c0_18 = arith.constant 0 : index
      %c0_19 = arith.constant 0 : index
      %19 = vector.load %arg7[%c0_18, %c0_19] : memref<1x128xf32, #tpu.memory_space<vmem>>, vector<1x128xf32>
      %20 = vector.broadcast %18 : vector<8x1xf32> to vector<8x128xf32>
      %21 = vector.broadcast %19 : vector<1x128xf32> to vector<8x128xf32>
      %22 = arith.mulf %20, %21 : vector<8x128xf32>
      %23 = arith.addf %17, %22 : vector<8x128xf32>
      %c0_20 = arith.constant 0 : index
      %c0_21 = arith.constant 0 : index
      %24 = vector.load %arg8[%c0_20, %c0_21] : memref<1x128xf32, #tpu.memory_space<vmem>>, vector<1x128xf32>
      %25 = vector.broadcast %24 : vector<1x128xf32> to vector<8x128xf32>
      %26 = arith.addf %23, %25 : vector<8x128xf32>
      %c0_22 = arith.constant 0 : index
      %c0_23 = arith.constant 0 : index
      %27 = vector.load %arg9[%c0_22, %c0_23] : memref<8x128xf32, #tpu.memory_space<vmem>>, vector<8x128xf32>
      tpu.vector_store %arg9[%c0_22, %c0_23], %26 {strides = array<i32>} : memref<8x128xf32, #tpu.memory_space<vmem>>, vector<8x128xf32>,
    } else {
    }
    return
  }
  func.func @transform_0(%arg0: i32, %arg1: i32) -> (i32, i32) {
    %c0_i32 = arith.constant 0 : i32
    return %arg0, %arg1 : i32, i32
  }
  func.func @transform_1(%arg0: i32, %arg1: i32) -> (i32, i32) {
    %c0_i32 = arith.constant 0 : i32
    %c0_i32_0 = arith.constant 0 : i32
    return %arg0, %c0_i32 : i32, i32
  }
  func.func @transform_2(%arg0: i32, %arg1: i32) -> (i32, i32) {
    %c0_i32 = arith.constant 0 : i32
    %c0_i32_0 = arith.constant 0 : i32
    return %arg1, %c0_i32 : i32, i32
  }
  func.func @transform_3(%arg0: i32, %arg1: i32) -> (i32, i32) {
    %c0_i32 = arith.constant 0 : i32
    %c0_i32_0 = arith.constant 0 : i32
    %c0_i32_1 = arith.constant 0 : i32
    return %c0_i32, %c0_i32_0 : i32, i32
  }
  func.func @transform_4(%arg0: i32, %arg1: i32) -> (i32, i32) {
    %c0_i32 = arith.constant 0 : i32
    %c0_i32_0 = arith.constant 0 : i32
    %c0_i32_1 = arith.constant 0 : i32
    return %c0_i32, %c0_i32_0 : i32, i32
  }
  func.func @transform_5(%arg0: i32, %arg1: i32) -> (i32, i32) {
    %c0_i32 = arith.constant 0 : i32
    %c0_i32_0 = arith.constant 0 : i32
    %c0_i32_1 = arith.constant 0 : i32
    return %c0_i32, %c0_i32_0 : i32, i32
  }
  func.func @transform_6(%arg0: i32, %arg1: i32) -> (i32, i32) {
    %c0_i32 = arith.constant 0 : i32
    %c0_i32_0 = arith.constant 0 : i32
    %c0_i32_1 = arith.constant 0 : i32
    return %c0_i32, %c0_i32_0 : i32, i32
  }
  func.func @transform_7(%arg0: i32, %arg1: i32) -> (i32, i32) {
    %c0_i32 = arith.constant 0 : i32
    %c0_i32_0 = arith.constant 0 : i32
    return %arg0, %c0_i32 : i32, i32
  }
}

</mosaic_0001>

<llo_original>
// kernel: tpu_custom_call.1
$region0: #{tpu_custom_call.1}
  #allocation0 [shape = 'u32[]', space=smem, size = 0x4, offset = 0x4, fixed_abs, tag = 'smem constant byte address 0x4 - core index']
  #allocation1 [shape = 'u32[144,128]{1,0:T(1,128)}', space=vmem, size = 0x12000, scoped, tag = 'internal scratch']
  #allocation2 [shape = 'f32[8,1024]{1,0:T(8,128)}', space=vmem, size = 0x8000, scoped, tag = 'scratch operand']
  %s0 = inlined_call_operand.hbm [shape: bf16[8,1024], index: 0, kind: input, shape index: {}]
  %s1 = inlined_call_operand.vmem [shape: f32[8,1], index: 1, kind: input, shape index: {}]
  %s2 = inlined_call_operand.hbm [shape: bf16[1024,1024], index: 2, kind: input, shape index: {}]
  %s3 = inlined_call_operand.hbm [shape: f32[1,1024], index: 3, kind: input, shape index: {}]
  %s4 = inlined_call_operand.hbm [shape: f32[1024,128], index: 4, kind: input, shape index: {}]
  %s5 = inlined_call_operand.hbm [shape: f32[1,128], index: 5, kind: input, shape index: {}]
  %s6 = inlined_call_operand.hbm [shape: f32[1,128], index: 6, kind: input, shape index: {}]
  %s7 = inlined_call_operand.hbm [shape: f32[8,128], index: 7, kind: output, shape index: {}]
  %s8 = sld [smem:[#allocation0]]
  $region93: #{tpu_custom_call.1} parent=0
    _
  %s10 = ssub.s32 1, %s8
  %s11 = scalar_select 0, %s10, %s8
  $region1: #{tpu_custom_call.1} parent=0
    #allocation3 [shape = 'u8[16384]{0}', space=vmem, size = 0x4000, scoped, tag = 'input window, operand 0']
    #allocation4 [shape = 's32[2]{0}', space=sflag, size = 0x8, scoped, tag = 'scoped memory for tpu_custom_call.1']
    #allocation5 [shape = 's32[2]{0}', space=sflag, size = 0x8, scoped, tag = 'scoped memory for tpu_custom_call.1']
    #allocation6 [shape = 'u8[2097152]{0}', space=vmem, size = 0x200000, scoped, tag = 'input window, operand 2']
    #allocation7 [shape = 's32[2]{0}', space=sflag, size = 0x8, scoped, tag = 'scoped memory for tpu_custom_call.1']
    #allocation8 [shape = 'u8[4096]{0}', space=vmem, size = 0x1000, scoped, tag = 'input window, operand 3, single buffered']
    #allocation9 [shape = 'u8[524288]{0}', space=vmem, size = 0x80000, scoped, tag = 'input window, operand 4, single buffered']
    #allocation10 [shape = 's32[1]{0}', space=sflag, size = 0x4, scoped, tag = 'scoped memory for tpu_custom_call.1']
    #allocation11 [shape = 'u8[512]{0}', space=vmem, size = 0x400, scoped, tag = 'input window, operand 5, single buffered']
    #allocation12 [shape = 'u8[512]{0}', space=vmem, size = 0x400, scoped, tag = 'input window, operand 6, single buffered']
    #allocation13 [shape = 's32[1]{0}', space=sflag, size = 0x4, scoped, tag = 'scoped memory for tpu_custom_call.1']
    #allocation14 [shape = 'u8[4096]{0}', space=vmem, size = 0x1000, scoped, tag = 'output window, operand 0, single buffered']
    %12 = vsyncpa [#allocation4], 0
    %s13 = scalar_lea.sflag [#allocation4], 1
    %14 = vsyncpa %s13, 0
    %15 = vsyncpa [#allocation7], 0
    %s16 = scalar_lea.sflag [#allocation7], 1
    %17 = vsyncpa %s16, 0
    %18 = vsyncpa [#allocation10], 0
    %19 = vsyncpa [#allocation13], 0
    %20 = vsyncpa [#allocation5], 0
    loop: start=0, step=1, limit=4
    $region2: #{tpu_custom_call.1} parent=1 // loop_pre_header
      _
    $region3: #{tpu_custom_call.1} parent=1 // loop_header
      %s22 = sphi 0, %s26
      %p23 = scmp.ge.s32.totalorder %s22, 4
      %s29 = sphi 0, %s41
      %s30 = sphi 0, %s37
      %s31 = sphi 0, %s29
      %s32 = sphi 0, %s30
      %s33 = sphi 0, %s31
      %s34 = sphi 0, %s32
      %s46 = sphi 0, %s48
      %s49 = sphi 0, %s46
      %s50 = sphi 0, %s49
      %s66 = sphi 0, %s50
      %s72 = sphi 0, %s74
      %s75 = sphi 0, %s72
      %s76 = sphi 0, %s75
      %s92 = sphi 0, %s76
      %s98 = sphi 0, %s100
      %s101 = sphi 0, %s98
      %s102 = sphi 0, %s101
      %s118 = sphi 0, %s102
      %s122 = sphi 0, %s122
      %s124 = sphi 0, %s122
      %s125 = sphi 0, %s124
      %s139 = sphi 0, %s125
      %s143 = sphi 0, %s143
      %s145 = sphi 0, %s143
      %s146 = sphi 0, %s145
      %s160 = sphi 0, %s146
      %s164 = sphi 0, %s164
      %s166 = sphi 0, %s164
      %s167 = sphi 0, %s166
      %s181 = sphi 0, %s167
      %s185 = sphi 0, %s185
      %s187 = sphi 0, %s185
      %s188 = sphi 0, %s187
      %s202 = sphi 0, %s188
      %s208 = sphi 0, %s210
      %s211 = sphi 0, %s208
      %s212 = sphi 0, %s211
      %s228 = sphi 0, %s212
    $region4: #{tpu_custom_call.1} parent=1 // loop_header_branch
      %25 = sbr.rel (%p23) target = $region8
    $region5: #{tpu_custom_call.1} parent=1 // loop_body
      %s27 = ssub.s32 %s22, 1
      %s28 = ssub.s32 %s22, 2
      %s35 = sadd.s32 1, %s30
      %p36 = scmp.ge.s32.totalorder %s35, 2
      %s37 = scalar_select %p36, 0, %s35
      %s38 = sadd.s32 1, %s29
      %s39 = scalar_select %p36, %s38, %s29
      %p40 = scmp.ge.s32.totalorder %s39, 1
      %s41 = scalar_select %p40, 0, %s39
      %s42 = ssub.s32 %s29, %s41
      %s43 = ssub.s32 %s30, %s37
      %s44 = sor.u32 %s42, %s43
      %p45 = scmp.eq.s32.totalorder %s44, 0
      %s47 = sadd.s32 %s46, 1
      %s48 = scalar_select %p45, %s46, %s47
      %p51 = pneg %p45
      %p52 = scmp.eq.s32.totalorder %s22, 1
      %p53 = por %p51, %p52
      %p54 = scmp.ne.s32.totalorder %s46, %s49
      %p55 = scmp.eq.s32.totalorder %s22, 0
      %p56 = por %p54, %p55
      %p57 = scmp.ne.s32.totalorder %s46, %s49
      %p58 = scmp.eq.s32.totalorder %s27, 1
      %p59 = por %p57, %p58
      %p60 = scmp.ne.s32.totalorder %s49, %s50
      %p61 = scmp.eq.s32.totalorder %s27, 0
      %p62 = por %p60, %p61
      %p63 = scmp.ne.s32.totalorder %s49, %s50
      %p64 = scmp.eq.s32.totalorder %s28, 1
      %p65 = por %p63, %p64
      %p67 = scmp.ne.s32.totalorder %s50, %s66
      %p68 = scmp.eq.s32.totalorder %s28, 0
      %p69 = por %p67, %p68
      %s70 = ssub.s32 %s29, %s41
      %p71 = scmp.eq.s32.totalorder %s70, 0
      %s73 = sadd.s32 %s72, 1
      %s74 = scalar_select %p71, %s72, %s73
      %p77 = pneg %p71
      %p78 = scmp.eq.s32.totalorder %s22, 1
      %p79 = por %p77, %p78
      %p80 = scmp.ne.s32.totalorder %s72, %s75
      %p81 = scmp.eq.s32.totalorder %s22, 0
      %p82 = por %p80, %p81
      %p83 = scmp.ne.s32.totalorder %s72, %s75
      %p84 = scmp.eq.s32.totalorder %s27, 1
      %p85 = por %p83, %p84
      %p86 = scmp.ne.s32.totalorder %s75, %s76
      %p87 = scmp.eq.s32.totalorder %s27, 0
      %p88 = por %p86, %p87
      %p89 = scmp.ne.s32.totalorder %s75, %s76
      %p90 = scmp.eq.s32.totalorder %s28, 1
      %p91 = por %p89, %p90
      %p93 = scmp.ne.s32.totalorder %s76, %s92
      %p94 = scmp.eq.s32.totalorder %s28, 0
      %p95 = por %p93, %p94
      %s96 = ssub.s32 %s30, %s37
      %p97 = scmp.eq.s32.totalorder %s96, 0
      %s99 = sadd.s32 %s98, 1
      %s100 = scalar_select %p97, %s98, %s99
      %p103 = pneg %p97
      %p104 = scmp.eq.s32.totalorder %s22, 1
      %p105 = por %p103, %p104
      %p106 = scmp.ne.s32.totalorder %s98, %s101
      %p107 = scmp.eq.s32.totalorder %s22, 0
      %p108 = por %p106, %p107
      %p109 = scmp.ne.s32.totalorder %s98, %s101
      %p110 = scmp.eq.s32.totalorder %s27, 1
      %p111 = por %p109, %p110
      %p112 = scmp.ne.s32.totalorder %s101, %s102
      %p113 = scmp.eq.s32.totalorder %s27, 0
      %p114 = por %p112, %p113
      %p115 = scmp.ne.s32.totalorder %s101, %s102
      %p116 = scmp.eq.s32.totalorder %s28, 1
      %p117 = por %p115, %p116
      %p119 = scmp.ne.s32.totalorder %s102, %s118
      %p120 = scmp.eq.s32.totalorder %s28, 0
      %p121 = por %p119, %p120
      %s123 = sadd.s32 %s122, 1
      %p126 = scmp.eq.s32.totalorder %s22, 1
      %p127 = scmp.ne.s32.totalorder %s122, %s124
      %p128 = scmp.eq.s32.totalorder %s22, 0
      %p129 = por %p127, %p128
      %p130 = scmp.ne.s32.totalorder %s122, %s124
      %p131 = scmp.eq.s32.totalorder %s27, 1
      %p132 = por %p130, %p131
      %p133 = scmp.ne.s32.totalorder %s124, %s125
      %p134 = scmp.eq.s32.totalorder %s27, 0
      %p135 = por %p133, %p134
      %p136 = scmp.ne.s32.totalorder %s124, %s125
      %p137 = scmp.eq.s32.totalorder %s28, 1
      %p138 = por %p136, %p137
      %p140 = scmp.ne.s32.totalorder %s125, %s139
      %p141 = scmp.eq.s32.totalorder %s28, 0
      %p142 = por %p140, %p141
      %s144 = sadd.s32 %s143, 1
      %p147 = scmp.eq.s32.totalorder %s22, 1
      %p148 = scmp.ne.s32.totalorder %s143, %s145
      %p149 = scmp.eq.s32.totalorder %s22, 0
      %p150 = por %p148, %p149
      %p151 = scmp.ne.s32.totalorder %s143, %s145
      %p152 = scmp.eq.s32.totalorder %s27, 1
      %p153 = por %p151, %p152
      %p154 = scmp.ne.s32.totalorder %s145, %s146
      %p155 = scmp.eq.s32.totalorder %s27, 0
      %p156 = por %p154, %p155
      %p157 = scmp.ne.s32.totalorder %s145, %s146
      %p158 = scmp.eq.s32.totalorder %s28, 1
      %p159 = por %p157, %p158
      %p161 = scmp.ne.s32.totalorder %s146, %s160
      %p162 = scmp.eq.s32.totalorder %s28, 0
      %p163 = por %p161, %p162
      %s165 = sadd.s32 %s164, 1
      %p168 = scmp.eq.s32.totalorder %s22, 1
      %p169 = scmp.ne.s32.totalorder %s164, %s166
      %p170 = scmp.eq.s32.totalorder %s22, 0
      %p171 = por %p169, %p170
      %p172 = scmp.ne.s32.totalorder %s164, %s166
      %p173 = scmp.eq.s32.totalorder %s27, 1
      %p174 = por %p172, %p173
      %p175 = scmp.ne.s32.totalorder %s166, %s167
      %p176 = scmp.eq.s32.totalorder %s27, 0
      %p177 = por %p175, %p176
      %p178 = scmp.ne.s32.totalorder %s166, %s167
      %p179 = scmp.eq.s32.totalorder %s28, 1
      %p180 = por %p178, %p179
      %p182 = scmp.ne.s32.totalorder %s167, %s181
      %p183 = scmp.eq.s32.totalorder %s28, 0
      %p184 = por %p182, %p183
      %s186 = sadd.s32 %s185, 1
      %p189 = scmp.eq.s32.totalorder %s22, 1
      %p190 = scmp.ne.s32.totalorder %s185, %s187
      %p191 = scmp.eq.s32.totalorder %s22, 0
      %p192 = por %p190, %p191
      %p193 = scmp.ne.s32.totalorder %s185, %s187
      %p194 = scmp.eq.s32.totalorder %s27, 1
      %p195 = por %p193, %p194
      %p196 = scmp.ne.s32.totalorder %s187, %s188
      %p197 = scmp.eq.s32.totalorder %s27, 0
      %p198 = por %p196, %p197
      %p199 = scmp.ne.s32.totalorder %s187, %s188
      %p200 = scmp.eq.s32.totalorder %s28, 1
      %p201 = por %p199, %p200
      %p203 = scmp.ne.s32.totalorder %s188, %s202
      %p204 = scmp.eq.s32.totalorder %s28, 0
      %p205 = por %p203, %p204
      %s206 = ssub.s32 %s29, %s41
      %p207 = scmp.eq.s32.totalorder %s206, 0
      %s209 = sadd.s32 %s208, 1
      %s210 = scalar_select %p207, %s208, %s209
      %p213 = pneg %p207
      %p214 = scmp.eq.s32.totalorder %s22, 1
      %p215 = por %p213, %p214
      %p216 = scmp.ne.s32.totalorder %s208, %s211
      %p217 = scmp.eq.s32.totalorder %s22, 0
      %p218 = por %p216, %p217
      %p219 = scmp.ne.s32.totalorder %s208, %s211
      %p220 = scmp.eq.s32.totalorder %s27, 1
      %p221 = por %p219, %p220
      %p222 = scmp.ne.s32.totalorder %s211, %s212
      %p223 = scmp.eq.s32.totalorder %s27, 0
      %p224 = por %p222, %p223
      %p225 = scmp.ne.s32.totalorder %s211, %s212
      %p226 = scmp.eq.s32.totalorder %s28, 1
      %p227 = por %p225, %p226
      %p229 = scmp.ne.s32.totalorder %s212, %s228
      %p230 = scmp.eq.s32.totalorder %s28, 0
      %p231 = por %p229, %p230
      %p232 = scmp.le.s32.totalorder 1, %s22
      %p233 = scmp.lt.s32.totalorder %s22, 3
      %p234 = pnand %p232, %p233
      %p235 = pneg %p234
      // Predicated region
      $region9: #{tpu_custom_call.1} parent=5 // pred_check
        _
      $region10: #{tpu_custom_call.1} parent=5 // pred_check_branch
        %237 = sbr.rel (%p234) target = $region12
      $region11: #{tpu_custom_call.1} parent=5 // pred_region
        %s238 = ssub.s32 %s22, 1
        // Predicated region
        $region13: #{tpu_custom_call.1} parent=11 // pred_check
          %p239 = pneg %p88
        $region14: #{tpu_custom_call.1} parent=11 // pred_check_branch
          %241 = sbr.rel (%p239) target = $region16
        $region15: #{tpu_custom_call.1} parent=11 // pred_region
          %p242 = scmp.lt.s32.totalorder %s31, 0
          %s243 = scalar_select %p242, %s31, 0
          %s244 = smul.addr %s243, 8
          %s245 = scalar_lea.vmem %s1, %s244
        $region16: #{tpu_custom_call.1} parent=11 // pred_fallthru
          _
        // Predicated region
        $region17: #{tpu_custom_call.1} parent=11 // pred_check
          %p246 = pneg %p135
        $region18: #{tpu_custom_call.1} parent=11 // pred_check_branch
          %248 = sbr.rel (%p246) target = $region20
        $region19: #{tpu_custom_call.1} parent=11 // pred_region
          %s250 = ssub.s32 128, 128
          %251 = vsyncadd [#allocation7], %s250
          %s253 = sshll.u32 [#allocation8], 4
          %s254 = int_to_ptr.vmem [resolvable:$true] %s253
          %256 = dma.hbm_to_vmem [thread:$0]  %s3, 128, %s254, [#allocation7]
        $region20: #{tpu_custom_call.1} parent=11 // pred_fallthru
          _
        // Predicated region
        $region21: #{tpu_custom_call.1} parent=11 // pred_check
          %p257 = pneg %p156
        $region22: #{tpu_custom_call.1} parent=11 // pred_check_branch
          %259 = sbr.rel (%p257) target = $region24
        $region23: #{tpu_custom_call.1} parent=11 // pred_region
          %s261 = ssub.s32 16384, 16384
          %262 = vsyncadd [#allocation10], %s261
          %s263 = sshll.u32 [#allocation9], 4
          %s264 = int_to_ptr.vmem [resolvable:$true] %s263
          %269 = dma.hbm_to_vmem [thread:$0]  %s4, 16384, %s264, [#allocation10], 128, 128, 8
        $region24: #{tpu_custom_call.1} parent=11 // pred_fallthru
          _
        // Predicated region
        $region25: #{tpu_custom_call.1} parent=11 // pred_check
          %p270 = pneg %p177
        $region26: #{tpu_custom_call.1} parent=11 // pred_check_branch
          %272 = sbr.rel (%p270) target = $region28
        $region27: #{tpu_custom_call.1} parent=11 // pred_region
          %s274 = ssub.s32 16, 16
          %275 = vsyncadd [#allocation10], %s274
          %s277 = sshll.u32 [#allocation11], 4
          %s278 = int_to_ptr.vmem [resolvable:$true] %s277
          %280 = dma.hbm_to_vmem [thread:$0]  %s5, 16, %s278, [#allocation10]
        $region28: #{tpu_custom_call.1} parent=11 // pred_fallthru
          _
        // Predicated region
        $region29: #{tpu_custom_call.1} parent=11 // pred_check
          %p281 = pneg %p198
        $region30: #{tpu_custom_call.1} parent=11 // pred_check_branch
          %283 = sbr.rel (%p281) target = $region32
        $region31: #{tpu_custom_call.1} parent=11 // pred_region
          %s285 = ssub.s32 16, 16
          %286 = vsyncadd [#allocation13], %s285
          %s288 = sshll.u32 [#allocation12], 4
          %s289 = int_to_ptr.vmem [resolvable:$true] %s288
          %291 = dma.hbm_to_vmem [thread:$0]  %s6, 16, %s289, [#allocation13]
        $region32: #{tpu_custom_call.1} parent=11 // pred_fallthru
          _
      $region12: #{tpu_custom_call.1} parent=5 // pred_fallthru
        _
      %p292 = scmp.lt.s32.totalorder %s22, 2
      // Predicated region
      $region33: #{tpu_custom_call.1} parent=5 // pred_check
        %p293 = pneg %p292
      $region34: #{tpu_custom_call.1} parent=5 // pred_check_branch
        %295 = sbr.rel (%p293) target = $region36
      $region35: #{tpu_custom_call.1} parent=5 // pred_region
        // Predicated region
        $region37: #{tpu_custom_call.1} parent=35 // pred_check
          %p296 = pneg %p56
        $region38: #{tpu_custom_call.1} parent=35 // pred_check_branch
          %298 = sbr.rel (%p296) target = $region40
        $region39: #{tpu_custom_call.1} parent=35 // pred_region
          %s299 = sand.u32 %s46, 1
          %s300 = scalar_lea.sflag [#allocation4], %s299
          %s301 = sand.u32 %s46, 1
          %s302 = smul.addr %s301, 16
          %s303 = scalar_lea.vmem [#allocation3], %s302
          %s304 = smul.u32 4, %s30
          %s306 = ssub.s32 256, 256
          %307 = vsyncadd %s300, %s306
          %s308 = smul.addr %s29, 8
          %s309 = sadd.s32 %s304, %s308
          %s310 = smul.addr %s309, 64
          %s311 = scalar_lea.hbm %s0, %s310
          %s313 = sshll.u32 %s303, 4
          %s314 = int_to_ptr.vmem [resolvable:$true] %s313
          %316 = dma.hbm_to_vmem [thread:$0]  %s311, 256, %s314, %s300
        $region40: #{tpu_custom_call.1} parent=35 // pred_fallthru
          _
        // Predicated region
        $region41: #{tpu_custom_call.1} parent=35 // pred_check
          %p317 = pneg %p108
        $region42: #{tpu_custom_call.1} parent=35 // pred_check_branch
          %319 = sbr.rel (%p317) target = $region44
        $region43: #{tpu_custom_call.1} parent=35 // pred_region
          %s320 = sand.u32 %s22, 1
          %s321 = scalar_lea.sflag [#allocation7], %s320
          %s322 = sand.u32 %s98, 1
          %s323 = smul.addr %s322, 2048
          %s324 = scalar_lea.vmem [#allocation6], %s323
          %s325 = smul.u32 64, %s30
          %s327 = ssub.s32 32768, 32768
          %328 = vsyncadd %s321, %s327
          %s329 = smul.addr %s325, 8
          %s330 = smul.addr %s329, 64
          %s331 = scalar_lea.hbm %s2, %s330
          %s332 = sshll.u32 %s324, 4
          %s333 = int_to_ptr.vmem [resolvable:$true] %s332
          %338 = dma.hbm_to_vmem [thread:$0]  %s331, 32768, %s333, %s321, 512, 512, 32
        $region44: #{tpu_custom_call.1} parent=35 // pred_fallthru
          _
      $region36: #{tpu_custom_call.1} parent=5 // pred_fallthru
        _
      %p339 = scmp.le.s32.totalorder 1, %s22
      %p340 = scmp.lt.s32.totalorder %s22, 3
      %p341 = pnand %p339, %p340
      %p342 = pneg %p341
      // Predicated region
      $region45: #{tpu_custom_call.1} parent=5 // pred_check
        _
      $region46: #{tpu_custom_call.1} parent=5 // pred_check_branch
        %344 = sbr.rel (%p341) target = $region48
      $region47: #{tpu_custom_call.1} parent=5 // pred_region
        %s345 = ssub.s32 %s22, 1
        %s346 = sand.u32 %s49, 1
        %s347 = scalar_lea.sflag [#allocation4], %s346
        %s348 = sand.u32 %s49, 1
        %s349 = smul.addr %s348, 16
        %s350 = scalar_lea.vmem [#allocation3], %s349
        // Predicated region
        $region49: #{tpu_custom_call.1} parent=47 // pred_check
          %p351 = pneg %p62
        $region50: #{tpu_custom_call.1} parent=47 // pred_check_branch
          %353 = sbr.rel (%p351) target = $region52
        $region51: #{tpu_custom_call.1} parent=47 // pred_region
          %354 = dma.done %s347, 256
        $region52: #{tpu_custom_call.1} parent=47 // pred_fallthru
          _
        %s355 = sand.u32 %s27, 1
        %s356 = scalar_lea.sflag [#allocation7], %s355
        %s357 = sand.u32 %s101, 1
        %s358 = smul.addr %s357, 2048
        %s359 = scalar_lea.vmem [#allocation6], %s358
        // Predicated region
        $region53: #{tpu_custom_call.1} parent=47 // pred_check
          %p360 = pneg %p114
        $region54: #{tpu_custom_call.1} parent=47 // pred_check_branch
          %362 = sbr.rel (%p360) target = $region56
        $region55: #{tpu_custom_call.1} parent=47 // pred_region
          %363 = dma.done %s356, 32768
        $region56: #{tpu_custom_call.1} parent=47 // pred_fallthru
          _
        // Predicated region
        $region57: #{tpu_custom_call.1} parent=47 // pred_check
          %p364 = pneg %p135
        $region58: #{tpu_custom_call.1} parent=47 // pred_check_branch
          %366 = sbr.rel (%p364) target = $region60
        $region59: #{tpu_custom_call.1} parent=47 // pred_region
          %367 = dma.done [#allocation7], 128
        $region60: #{tpu_custom_call.1} parent=47 // pred_fallthru
          _
        // Predicated region
        $region61: #{tpu_custom_call.1} parent=47 // pred_check
          %p368 = pneg %p156
        $region62: #{tpu_custom_call.1} parent=47 // pred_check_branch
          %370 = sbr.rel (%p368) target = $region64
        $region63: #{tpu_custom_call.1} parent=47 // pred_region
          %371 = dma.done [#allocation10], 16384
        $region64: #{tpu_custom_call.1} parent=47 // pred_fallthru
          _
        // Predicated region
        $region65: #{tpu_custom_call.1} parent=47 // pred_check
          %p372 = pneg %p177
        $region66: #{tpu_custom_call.1} parent=47 // pred_check_branch
          %374 = sbr.rel (%p372) target = $region68
        $region67: #{tpu_custom_call.1} parent=47 // pred_region
          %375 = dma.done [#allocation10], 16
        $region68: #{tpu_custom_call.1} parent=47 // pred_fallthru
          _
        // Predicated region
        $region69: #{tpu_custom_call.1} parent=47 // pred_check
          %p376 = pneg %p198
        $region70: #{tpu_custom_call.1} parent=47 // pred_check_branch
          %378 = sbr.rel (%p376) target = $region72
        $region71: #{tpu_custom_call.1} parent=47 // pred_region
          %379 = dma.done [#allocation13], 16
        $region72: #{tpu_custom_call.1} parent=47 // pred_fallthru
          _
        %s380 = sand.u32 %s49, 1
        %s381 = scalar_lea.sflag [#allocation4], %s380
        %s382 = sand.u32 %s49, 1
        %s383 = smul.addr %s382, 16
        %s384 = scalar_lea.vmem [#allocation3], %s383
        %p385 = pneg %p62
        %p386 = pneg %p59
        %p387 = scmp.lt.s32.totalorder %s31, 0
        %s388 = scalar_select %p387, %s31, 0
        %s389 = smul.addr %s388, 8
        %s390 = scalar_lea.vmem %s1, %s389
        %p391 = pneg %p88
        %p392 = pneg %p85
        %s393 = sand.u32 %s27, 1
        %s394 = scalar_lea.sflag [#allocation7], %s393
        %s395 = sand.u32 %s101, 1
        %s396 = smul.addr %s395, 2048
        %s397 = scalar_lea.vmem [#allocation6], %s396
        %p398 = pneg %p114
        %p399 = pneg %p111
        %p400 = pneg %p135
        %p401 = pneg %p132
        %p402 = pneg %p156
        %p403 = pneg %p153
        %p404 = pneg %p177
        %p405 = pneg %p174
        %p406 = pneg %p198
        %p407 = pneg %p195
        %p408 = pneg %p224
        %p409 = pneg %p221
        %s410 = smul.u32 4, %s32
        %p411 = scmp.lt.s32.totalorder %s31, 0
        %s412 = scalar_select %p411, %s31, 0
        %s413 = smul.addr %s412, 8
        %s414 = scalar_lea.vmem %s1, %s413
        %s415 = smul.u32 64, %s32
        %p416 = scmp.eq.s32.totalorder %s32, 0
        // Predicated region
        $region73: #{tpu_custom_call.1} parent=47 // pred_check
          %p417 = pneg %p416
        $region74: #{tpu_custom_call.1} parent=47 // pred_check_branch
          %419 = sbr.rel (%p417) target = $region76
        $region75: #{tpu_custom_call.1} parent=47 // pred_region
          %420 = vst [vmem:[#allocation2] sm:$0xff] 0.0
          %421 = vst [vmem:[#allocation2 + $0x8] sm:$0xff] 0.0
          %422 = vst [vmem:[#allocation2 + $0x10] sm:$0xff] 0.0
          %423 = vst [vmem:[#allocation2 + $0x18] sm:$0xff] 0.0
          %424 = vst [vmem:[#allocation2 + $0x20] sm:$0xff] 0.0
          %425 = vst [vmem:[#allocation2 + $0x28] sm:$0xff] 0.0
          %426 = vst [vmem:[#allocation2 + $0x30] sm:$0xff] 0.0
          %427 = vst [vmem:[#allocation2 + $0x38] sm:$0xff] 0.0
        $region76: #{tpu_custom_call.1} parent=47 // pred_fallthru
          _
        %v428 = vld [vmem:[#allocation2] sm:$0xff]
        %v429 = vld [vmem:[#allocation2 + $0x8] sm:$0xff]
        %v430 = vld [vmem:[#allocation2 + $0x10] sm:$0xff]
        %v431 = vld [vmem:[#allocation2 + $0x18] sm:$0xff]
        %v432 = vld [vmem:[#allocation2 + $0x20] sm:$0xff]
        %v433 = vld [vmem:[#allocation2 + $0x28] sm:$0xff]
        %v434 = vld [vmem:[#allocation2 + $0x30] sm:$0xff]
        %v435 = vld [vmem:[#allocation2 + $0x38] sm:$0xff]
        %v436 = vld [vmem:[%s350] sm:$0xff]
        %v437 = vld [vmem:[%s350 + $0x8] sm:$0xff]
        %v438 = vld [vmem:[%s359] sm:$0xff]
        %v439 = vld [vmem:[%s359 + $0x8] sm:$0xff]
        %v440 = vld [vmem:[%s359 + $0x10] sm:$0xff]
        %v441 = vld [vmem:[%s359 + $0x18] sm:$0xff]
        %v442 = vld [vmem:[%s359 + $0x20] sm:$0xff]
        %v443 = vld [vmem:[%s359 + $0x28] sm:$0xff]
        %v444 = vld [vmem:[%s359 + $0x30] sm:$0xff]
        %v445 = vld [vmem:[%s359 + $0x38] sm:$0xff]
        %v446 = vld [vmem:[%s359 + $0x40] sm:$0xff]
        %v447 = vld [vmem:[%s359 + $0x48] sm:$0xff]
        %v448 = vld [vmem:[%s359 + $0x50] sm:$0xff]
        %v449 = vld [vmem:[%s359 + $0x58] sm:$0xff]
        %v450 = vld [vmem:[%s359 + $0x60] sm:$0xff]
        %v451 = vld [vmem:[%s359 + $0x68] sm:$0xff]
        %v452 = vld [vmem:[%s359 + $0x70] sm:$0xff]
        %v453 = vld [vmem:[%s359 + $0x78] sm:$0xff]
        %v454 = vld [vmem:[%s359 + $0x80] sm:$0xff]
        %v455 = vld [vmem:[%s359 + $0x88] sm:$0xff]
        %v456 = vld [vmem:[%s359 + $0x90] sm:$0xff]
        %v457 = vld [vmem:[%s359 + $0x98] sm:$0xff]
        %v458 = vld [vmem:[%s359 + $0xa0] sm:$0xff]
        %v459 = vld [vmem:[%s359 + $0xa8] sm:$0xff]
        %v460 = vld [vmem:[%s359 + $0xb0] sm:$0xff]
        %v461 = vld [vmem:[%s359 + $0xb8] sm:$0xff]
        %v462 = vld [vmem:[%s359 + $0xc0] sm:$0xff]
        %v463 = vld [vmem:[%s359 + $0xc8] sm:$0xff]
        %v464 = vld [vmem:[%s359 + $0xd0] sm:$0xff]
        %v465 = vld [vmem:[%s359 + $0xd8] sm:$0xff]
        %v466 = vld [vmem:[%s359 + $0xe0] sm:$0xff]
        %v467 = vld [vmem:[%s359 + $0xe8] sm:$0xff]
        %v468 = vld [vmem:[%s359 + $0xf0] sm:$0xff]
        %v469 = vld [vmem:[%s359 + $0xf8] sm:$0xff]
        %v470 = vld [vmem:[%s359 + $0x100] sm:$0xff]
        %v471 = vld [vmem:[%s359 + $0x108] sm:$0xff]
        %v472 = vld [vmem:[%s359 + $0x110] sm:$0xff]
        %v473 = vld [vmem:[%s359 + $0x118] sm:$0xff]
        %v474 = vld [vmem:[%s359 + $0x120] sm:$0xff]
        %v475 = vld [vmem:[%s359 + $0x128] sm:$0xff]
        %v476 = vld [vmem:[%s359 + $0x130] sm:$0xff]
        %v477 = vld [vmem:[%s359 + $0x138] sm:$0xff]
        %v478 = vld [vmem:[%s359 + $0x140] sm:$0xff]
        %v479 = vld [vmem:[%s359 + $0x148] sm:$0xff]
        %v480 = vld [vmem:[%s359 + $0x150] sm:$0xff]
        %v481 = vld [vmem:[%s359 + $0x158] sm:$0xff]
        %v482 = vld [vmem:[%s359 + $0x160] sm:$0xff]
        %v483 = vld [vmem:[%s359 + $0x168] sm:$0xff]
        %v484 = vld [vmem:[%s359 + $0x170] sm:$0xff]
        %v485 = vld [vmem:[%s359 + $0x178] sm:$0xff]
        %v486 = vld [vmem:[%s359 + $0x180] sm:$0xff]
        %v487 = vld [vmem:[%s359 + $0x188] sm:$0xff]
        %v488 = vld [vmem:[%s359 + $0x190] sm:$0xff]
        %v489 = vld [vmem:[%s359 + $0x198] sm:$0xff]
        %v490 = vld [vmem:[%s359 + $0x1a0] sm:$0xff]
        %v491 = vld [vmem:[%s359 + $0x1a8] sm:$0xff]
        %v492 = vld [vmem:[%s359 + $0x1b0] sm:$0xff]
        %v493 = vld [vmem:[%s359 + $0x1b8] sm:$0xff]
        %v494 = vld [vmem:[%s359 + $0x1c0] sm:$0xff]
        %v495 = vld [vmem:[%s359 + $0x1c8] sm:$0xff]
        %v496 = vld [vmem:[%s359 + $0x1d0] sm:$0xff]
        %v497 = vld [vmem:[%s359 + $0x1d8] sm:$0xff]
        %v498 = vld [vmem:[%s359 + $0x1e0] sm:$0xff]
        %v499 = vld [vmem:[%s359 + $0x1e8] sm:$0xff]
        %v500 = vld [vmem:[%s359 + $0x1f0] sm:$0xff]
        %v501 = vld [vmem:[%s359 + $0x1f8] sm:$0xff]
        %v502 = vld [vmem:[%s359 + $0x200] sm:$0xff]
        %v503 = vld [vmem:[%s359 + $0x208] sm:$0xff]
        %v504 = vld [vmem:[%s359 + $0x210] sm:$0xff]
        %v505 = vld [vmem:[%s359 + $0x218] sm:$0xff]
        %v506 = vld [vmem:[%s359 + $0x220] sm:$0xff]
        %v507 = vld [vmem:[%s359 + $0x228] sm:$0xff]
        %v508 = vld [vmem:[%s359 + $0x230] sm:$0xff]
        %v509 = vld [vmem:[%s359 + $0x238] sm:$0xff]
        %v510 = vld [vmem:[%s359 + $0x240] sm:$0xff]
        %v511 = vld [vmem:[%s359 + $0x248] sm:$0xff]
        %v512 = vld [vmem:[%s359 + $0x250] sm:$0xff]
        %v513 = vld [vmem:[%s359 + $0x258] sm:$0xff]
        %v514 = vld [vmem:[%s359 + $0x260] sm:$0xff]
        %v515 = vld [vmem:[%s359 + $0x268] sm:$0xff]
        %v516 = vld [vmem:[%s359 + $0x270] sm:$0xff]
        %v517 = vld [vmem:[%s359 + $0x278] sm:$0xff]
        %v518 = vld [vmem:[%s359 + $0x280] sm:$0xff]
        %v519 = vld [vmem:[%s359 + $0x288] sm:$0xff]
        %v520 = vld [vmem:[%s359 + $0x290] sm:$0xff]
        %v521 = vld [vmem:[%s359 + $0x298] sm:$0xff]
        %v522 = vld [vmem:[%s359 + $0x2a0] sm:$0xff]
        %v523 = vld [vmem:[%s359 + $0x2a8] sm:$0xff]
        %v524 = vld [vmem:[%s359 + $0x2b0] sm:$0xff]
        %v525 = vld [vmem:[%s359 + $0x2b8] sm:$0xff]
        %v526 = vld [vmem:[%s359 + $0x2c0] sm:$0xff]
        %v527 = vld [vmem:[%s359 + $0x2c8] sm:$0xff]
        %v528 = vld [vmem:[%s359 + $0x2d0] sm:$0xff]
        %v529 = vld [vmem:[%s359 + $0x2d8] sm:$0xff]
        %v530 = vld [vmem:[%s359 + $0x2e0] sm:$0xff]
        %v531 = vld [vmem:[%s359 + $0x2e8] sm:$0xff]
        %v532 = vld [vmem:[%s359 + $0x2f0] sm:$0xff]
        %v533 = vld [vmem:[%s359 + $0x2f8] sm:$0xff]
        %v534 = vld [vmem:[%s359 + $0x300] sm:$0xff]
        %v535 = vld [vmem:[%s359 + $0x308] sm:$0xff]
        %v536 = vld [vmem:[%s359 + $0x310] sm:$0xff]
        %v537 = vld [vmem:[%s359 + $0x318] sm:$0xff]
        %v538 = vld [vmem:[%s359 + $0x320] sm:$0xff]
        %v539 = vld [vmem:[%s359 + $0x328] sm:$0xff]
        %v540 = vld [vmem:[%s359 + $0x330] sm:$0xff]
        %v541 = vld [vmem:[%s359 + $0x338] sm:$0xff]
        %v542 = vld [vmem:[%s359 + $0x340] sm:$0xff]
        %v543 = vld [vmem:[%s359 + $0x348] sm:$0xff]
        %v544 = vld [vmem:[%s359 + $0x350] sm:$0xff]
        %v545 = vld [vmem:[%s359 + $0x358] sm:$0xff]
        %v546 = vld [vmem:[%s359 + $0x360] sm:$0xff]
        %v547 = vld [vmem:[%s359 + $0x368] sm:$0xff]
        %v548 = vld [vmem:[%s359 + $0x370] sm:$0xff]
        %v549 = vld [vmem:[%s359 + $0x378] sm:$0xff]
        %v550 = vld [vmem:[%s359 + $0x380] sm:$0xff]
        %v551 = vld [vmem:[%s359 + $0x388] sm:$0xff]
        %v552 = vld [vmem:[%s359 + $0x390] sm:$0xff]
        %v553 = vld [vmem:[%s359 + $0x398] sm:$0xff]
        %v554 = vld [vmem:[%s359 + $0x3a0] sm:$0xff]
        %v555 = vld [vmem:[%s359 + $0x3a8] sm:$0xff]
        %v556 = vld [vmem:[%s359 + $0x3b0] sm:$0xff]
        %v557 = vld [vmem:[%s359 + $0x3b8] sm:$0xff]
        %v558 = vld [vmem:[%s359 + $0x3c0] sm:$0xff]
        %v559 = vld [vmem:[%s359 + $0x3c8] sm:$0xff]
        %v560 = vld [vmem:[%s359 + $0x3d0] sm:$0xff]
        %v561 = vld [vmem:[%s359 + $0x3d8] sm:$0xff]
        %v562 = vld [vmem:[%s359 + $0x3e0] sm:$0xff]
        %v563 = vld [vmem:[%s359 + $0x3e8] sm:$0xff]
        %v564 = vld [vmem:[%s359 + $0x3f0] sm:$0xff]
        %v565 = vld [vmem:[%s359 + $0x3f8] sm:$0xff]
        %v566 = vld [vmem:[%s359 + $0x400] sm:$0xff]
        %v567 = vld [vmem:[%s359 + $0x408] sm:$0xff]
        %v568 = vld [vmem:[%s359 + $0x410] sm:$0xff]
        %v569 = vld [vmem:[%s359 + $0x418] sm:$0xff]
        %v570 = vld [vmem:[%s359 + $0x420] sm:$0xff]
        %v571 = vld [vmem:[%s359 + $0x428] sm:$0xff]
        %v572 = vld [vmem:[%s359 + $0x430] sm:$0xff]
        %v573 = vld [vmem:[%s359 + $0x438] sm:$0xff]
        %v574 = vld [vmem:[%s359 + $0x440] sm:$0xff]
        %v575 = vld [vmem:[%s359 + $0x448] sm:$0xff]
        %v576 = vld [vmem:[%s359 + $0x450] sm:$0xff]
        %v577 = vld [vmem:[%s359 + $0x458] sm:$0xff]
        %v578 = vld [vmem:[%s359 + $0x460] sm:$0xff]
        %v579 = vld [vmem:[%s359 + $0x468] sm:$0xff]
        %v580 = vld [vmem:[%s359 + $0x470] sm:$0xff]
        %v581 = vld [vmem:[%s359 + $0x478] sm:$0xff]
        %v582 = vld [vmem:[%s359 + $0x480] sm:$0xff]
        %v583 = vld [vmem:[%s359 + $0x488] sm:$0xff]
        %v584 = vld [vmem:[%s359 + $0x490] sm:$0xff]
        %v585 = vld [vmem:[%s359 + $0x498] sm:$0xff]
        %v586 = vld [vmem:[%s359 + $0x4a0] sm:$0xff]
        %v587 = vld [vmem:[%s359 + $0x4a8] sm:$0xff]
        %v588 = vld [vmem:[%s359 + $0x4b0] sm:$0xff]
        %v589 = vld [vmem:[%s359 + $0x4b8] sm:$0xff]
        %v590 = vld [vmem:[%s359 + $0x4c0] sm:$0xff]
        %v591 = vld [vmem:[%s359 + $0x4c8] sm:$0xff]
        %v592 = vld [vmem:[%s359 + $0x4d0] sm:$0xff]
        %v593 = vld [vmem:[%s359 + $0x4d8] sm:$0xff]
        %v594 = vld [vmem:[%s359 + $0x4e0] sm:$0xff]
        %v595 = vld [vmem:[%s359 + $0x4e8] sm:$0xff]
        %v596 = vld [vmem:[%s359 + $0x4f0] sm:$0xff]
        %v597 = vld [vmem:[%s359 + $0x4f8] sm:$0xff]
        %v598 = vld [vmem:[%s359 + $0x500] sm:$0xff]
        %v599 = vld [vmem:[%s359 + $0x508] sm:$0xff]
        %v600 = vld [vmem:[%s359 + $0x510] sm:$0xff]
        %v601 = vld [vmem:[%s359 + $0x518] sm:$0xff]
        %v602 = vld [vmem:[%s359 + $0x520] sm:$0xff]
        %v603 = vld [vmem:[%s359 + $0x528] sm:$0xff]
        %v604 = vld [vmem:[%s359 + $0x530] sm:$0xff]
        %v605 = vld [vmem:[%s359 + $0x538] sm:$0xff]
        %v606 = vld [vmem:[%s359 + $0x540] sm:$0xff]
        %v607 = vld [vmem:[%s359 + $0x548] sm:$0xff]
        %v608 = vld [vmem:[%s359 + $0x550] sm:$0xff]
        %v609 = vld [vmem:[%s359 + $0x558] sm:$0xff]
        %v610 = vld [vmem:[%s359 + $0x560] sm:$0xff]
        %v611 = vld [vmem:[%s359 + $0x568] sm:$0xff]
        %v612 = vld [vmem:[%s359 + $0x570] sm:$0xff]
        %v613 = vld [vmem:[%s359 + $0x578] sm:$0xff]
        %v614 = vld [vmem:[%s359 + $0x580] sm:$0xff]
        %v615 = vld [vmem:[%s359 + $0x588] sm:$0xff]
        %v616 = vld [vmem:[%s359 + $0x590] sm:$0xff]
        %v617 = vld [vmem:[%s359 + $0x598] sm:$0xff]
        %v618 = vld [vmem:[%s359 + $0x5a0] sm:$0xff]
        %v619 = vld [vmem:[%s359 + $0x5a8] sm:$0xff]
        %v620 = vld [vmem:[%s359 + $0x5b0] sm:$0xff]
        %v621 = vld [vmem:[%s359 + $0x5b8] sm:$0xff]
        %v622 = vld [vmem:[%s359 + $0x5c0] sm:$0xff]
        %v623 = vld [vmem:[%s359 + $0x5c8] sm:$0xff]
        %v624 = vld [vmem:[%s359 + $0x5d0] sm:$0xff]
        %v625 = vld [vmem:[%s359 + $0x5d8] sm:$0xff]
        %v626 = vld [vmem:[%s359 + $0x5e0] sm:$0xff]
        %v627 = vld [vmem:[%s359 + $0x5e8] sm:$0xff]
        %v628 = vld [vmem:[%s359 + $0x5f0] sm:$0xff]
        %v629 = vld [vmem:[%s359 + $0x5f8] sm:$0xff]
        %v630 = vld [vmem:[%s359 + $0x600] sm:$0xff]
        %v631 = vld [vmem:[%s359 + $0x608] sm:$0xff]
        %v632 = vld [vmem:[%s359 + $0x610] sm:$0xff]
        %v633 = vld [vmem:[%s359 + $0x618] sm:$0xff]
        %v634 = vld [vmem:[%s359 + $0x620] sm:$0xff]
        %v635 = vld [vmem:[%s359 + $0x628] sm:$0xff]
        %v636 = vld [vmem:[%s359 + $0x630] sm:$0xff]
        %v637 = vld [vmem:[%s359 + $0x638] sm:$0xff]
        %v638 = vld [vmem:[%s359 + $0x640] sm:$0xff]
        %v639 = vld [vmem:[%s359 + $0x648] sm:$0xff]
        %v640 = vld [vmem:[%s359 + $0x650] sm:$0xff]
        %v641 = vld [vmem:[%s359 + $0x658] sm:$0xff]
        %v642 = vld [vmem:[%s359 + $0x660] sm:$0xff]
        %v643 = vld [vmem:[%s359 + $0x668] sm:$0xff]
        %v644 = vld [vmem:[%s359 + $0x670] sm:$0xff]
        %v645 = vld [vmem:[%s359 + $0x678] sm:$0xff]
        %v646 = vld [vmem:[%s359 + $0x680] sm:$0xff]
        %v647 = vld [vmem:[%s359 + $0x688] sm:$0xff]
        %v648 = vld [vmem:[%s359 + $0x690] sm:$0xff]
        %v649 = vld [vmem:[%s359 + $0x698] sm:$0xff]
        %v650 = vld [vmem:[%s359 + $0x6a0] sm:$0xff]
        %v651 = vld [vmem:[%s359 + $0x6a8] sm:$0xff]
        %v652 = vld [vmem:[%s359 + $0x6b0] sm:$0xff]
        %v653 = vld [vmem:[%s359 + $0x6b8] sm:$0xff]
        %v654 = vld [vmem:[%s359 + $0x6c0] sm:$0xff]
        %v655 = vld [vmem:[%s359 + $0x6c8] sm:$0xff]
        %v656 = vld [vmem:[%s359 + $0x6d0] sm:$0xff]
        %v657 = vld [vmem:[%s359 + $0x6d8] sm:$0xff]
        %v658 = vld [vmem:[%s359 + $0x6e0] sm:$0xff]
        %v659 = vld [vmem:[%s359 + $0x6e8] sm:$0xff]
        %v660 = vld [vmem:[%s359 + $0x6f0] sm:$0xff]
        %v661 = vld [vmem:[%s359 + $0x6f8] sm:$0xff]
        %v662 = vld [vmem:[%s359 + $0x700] sm:$0xff]
        %v663 = vld [vmem:[%s359 + $0x708] sm:$0xff]
        %v664 = vld [vmem:[%s359 + $0x710] sm:$0xff]
        %v665 = vld [vmem:[%s359 + $0x718] sm:$0xff]
        %v666 = vld [vmem:[%s359 + $0x720] sm:$0xff]
        %v667 = vld [vmem:[%s359 + $0x728] sm:$0xff]
        %v668 = vld [vmem:[%s359 + $0x730] sm:$0xff]
        %v669 = vld [vmem:[%s359 + $0x738] sm:$0xff]
        %v670 = vld [vmem:[%s359 + $0x740] sm:$0xff]
        %v671 = vld [vmem:[%s359 + $0x748] sm:$0xff]
        %v672 = vld [vmem:[%s359 + $0x750] sm:$0xff]
        %v673 = vld [vmem:[%s359 + $0x758] sm:$0xff]
        %v674 = vld [vmem:[%s359 + $0x760] sm:$0xff]
        %v675 = vld [vmem:[%s359 + $0x768] sm:$0xff]
        %v676 = vld [vmem:[%s359 + $0x770] sm:$0xff]
        %v677 = vld [vmem:[%s359 + $0x778] sm:$0xff]
        %v678 = vld [vmem:[%s359 + $0x780] sm:$0xff]
        %v679 = vld [vmem:[%s359 + $0x788] sm:$0xff]
        %v680 = vld [vmem:[%s359 + $0x790] sm:$0xff]
        %v681 = vld [vmem:[%s359 + $0x798] sm:$0xff]
        %v682 = vld [vmem:[%s359 + $0x7a0] sm:$0xff]
        %v683 = vld [vmem:[%s359 + $0x7a8] sm:$0xff]
        %v684 = vld [vmem:[%s359 + $0x7b0] sm:$0xff]
        %v685 = vld [vmem:[%s359 + $0x7b8] sm:$0xff]
        %v686 = vld [vmem:[%s359 + $0x7c0] sm:$0xff]
        %v687 = vld [vmem:[%s359 + $0x7c8] sm:$0xff]
        %v688 = vld [vmem:[%s359 + $0x7d0] sm:$0xff]
        %v689 = vld [vmem:[%s359 + $0x7d8] sm:$0xff]
        %v690 = vld [vmem:[%s359 + $0x7e0] sm:$0xff]
        %v691 = vld [vmem:[%s359 + $0x7e8] sm:$0xff]
        %v692 = vld [vmem:[%s359 + $0x7f0] sm:$0xff]
        %v693 = vld [vmem:[%s359 + $0x7f8] sm:$0xff]
        %v696 = vunpack.c.l.b16 %v436
        %v697 = vunpack.c.h.b16 %v436
        %v698 = vunpack.c.l.b16 %v437
        %v699 = vunpack.c.h.b16 %v437
        %v700 = vpack.c.b16 %v696, %v696
        %v701 = vpack.c.b16 %v697, %v697
        %v702 = vpack.c.b16 %v698, %v698
        %v703 = vpack.c.b16 %v699, %v699
        %v964 = vunpack.c.l.b16 %v438
        %v965 = vunpack.c.h.b16 %v438
        %v966 = vunpack.c.l.b16 %v439
        %v967 = vunpack.c.h.b16 %v439
        %v968 = vunpack.c.l.b16 %v440
        %v969 = vunpack.c.h.b16 %v440
        %v970 = vunpack.c.l.b16 %v441
        %v971 = vunpack.c.h.b16 %v441
        %v972 = vunpack.c.l.b16 %v442
        %v973 = vunpack.c.h.b16 %v442
        %v974 = vunpack.c.l.b16 %v443
        %v975 = vunpack.c.h.b16 %v443
        %v976 = vunpack.c.l.b16 %v444
        %v977 = vunpack.c.h.b16 %v444
        %v978 = vunpack.c.l.b16 %v445
        %v979 = vunpack.c.h.b16 %v445
        %v980 = vunpack.c.l.b16 %v446
        %v981 = vunpack.c.h.b16 %v446
        %v982 = vunpack.c.l.b16 %v447
        %v983 = vunpack.c.h.b16 %v447
        %v984 = vunpack.c.l.b16 %v448
        %v985 = vunpack.c.h.b16 %v448
        %v986 = vunpack.c.l.b16 %v449
        %v987 = vunpack.c.h.b16 %v449
        %v988 = vunpack.c.l.b16 %v450
        %v989 = vunpack.c.h.b16 %v450
        %v990 = vunpack.c.l.b16 %v451
        %v991 = vunpack.c.h.b16 %v451
        %v992 = vunpack.c.l.b16 %v452
        %v993 = vunpack.c.h.b16 %v452
        %v994 = vunpack.c.l.b16 %v453
        %v995 = vunpack.c.h.b16 %v453
        %v996 = vunpack.c.l.b16 %v454
        %v997 = vunpack.c.h.b16 %v454
        %v998 = vunpack.c.l.b16 %v455
        %v999 = vunpack.c.h.b16 %v455
        %v1000 = vunpack.c.l.b16 %v456
        %v1001 = vunpack.c.h.b16 %v456
        %v1002 = vunpack.c.l.b16 %v457
        %v1003 = vunpack.c.h.b16 %v457
        %v1004 = vunpack.c.l.b16 %v458
        %v1005 = vunpack.c.h.b16 %v458
        %v1006 = vunpack.c.l.b16 %v459
        %v1007 = vunpack.c.h.b16 %v459
        %v1008 = vunpack.c.l.b16 %v460
        %v1009 = vunpack.c.h.b16 %v460
        %v1010 = vunpack.c.l.b16 %v461
        %v1011 = vunpack.c.h.b16 %v461
        %v1012 = vunpack.c.l.b16 %v462
        %v1013 = vunpack.c.h.b16 %v462
        %v1014 = vunpack.c.l.b16 %v463
        %v1015 = vunpack.c.h.b16 %v463
        %v1016 = vunpack.c.l.b16 %v464
        %v1017 = vunpack.c.h.b16 %v464
        %v1018 = vunpack.c.l.b16 %v465
        %v1019 = vunpack.c.h.b16 %v465
        %v1020 = vunpack.c.l.b16 %v466
        %v1021 = vunpack.c.h.b16 %v466
        %v1022 = vunpack.c.l.b16 %v467
        %v1023 = vunpack.c.h.b16 %v467
        %v1024 = vunpack.c.l.b16 %v468
        %v1025 = vunpack.c.h.b16 %v468
        %v1026 = vunpack.c.l.b16 %v469
        %v1027 = vunpack.c.h.b16 %v469
        %v1028 = vunpack.c.l.b16 %v470
        %v1029 = vunpack.c.h.b16 %v470
        %v1030 = vunpack.c.l.b16 %v471
        %v1031 = vunpack.c.h.b16 %v471
        %v1032 = vunpack.c.l.b16 %v472
        %v1033 = vunpack.c.h.b16 %v472
        %v1034 = vunpack.c.l.b16 %v473
        %v1035 = vunpack.c.h.b16 %v473
        %v1036 = vunpack.c.l.b16 %v474
        %v1037 = vunpack.c.h.b16 %v474
        %v1038 = vunpack.c.l.b16 %v475
        %v1039 = vunpack.c.h.b16 %v475
        %v1040 = vunpack.c.l.b16 %v476
        %v1041 = vunpack.c.h.b16 %v476
        %v1042 = vunpack.c.l.b16 %v477
        %v1043 = vunpack.c.h.b16 %v477
        %v1044 = vunpack.c.l.b16 %v478
        %v1045 = vunpack.c.h.b16 %v478
        %v1046 = vunpack.c.l.b16 %v479
        %v1047 = vunpack.c.h.b16 %v479
        %v1048 = vunpack.c.l.b16 %v480
        %v1049 = vunpack.c.h.b16 %v480
        %v1050 = vunpack.c.l.b16 %v481
        %v1051 = vunpack.c.h.b16 %v481
        %v1052 = vunpack.c.l.b16 %v482
        %v1053 = vunpack.c.h.b16 %v482
        %v1054 = vunpack.c.l.b16 %v483
        %v1055 = vunpack.c.h.b16 %v483
        %v1056 = vunpack.c.l.b16 %v484
        %v1057 = vunpack.c.h.b16 %v484
        %v1058 = vunpack.c.l.b16 %v485
        %v1059 = vunpack.c.h.b16 %v485
        %v1060 = vunpack.c.l.b16 %v486
        %v1061 = vunpack.c.h.b16 %v486
        %v1062 = vunpack.c.l.b16 %v487
        %v1063 = vunpack.c.h.b16 %v487
        %v1064 = vunpack.c.l.b16 %v488
        %v1065 = vunpack.c.h.b16 %v488
        %v1066 = vunpack.c.l.b16 %v489
        %v1067 = vunpack.c.h.b16 %v489
        %v1068 = vunpack.c.l.b16 %v490
        %v1069 = vunpack.c.h.b16 %v490
        %v1070 = vunpack.c.l.b16 %v491
        %v1071 = vunpack.c.h.b16 %v491
        %v1072 = vunpack.c.l.b16 %v492
        %v1073 = vunpack.c.h.b16 %v492
        %v1074 = vunpack.c.l.b16 %v493
        %v1075 = vunpack.c.h.b16 %v493
        %v1076 = vunpack.c.l.b16 %v494
        %v1077 = vunpack.c.h.b16 %v494
        %v1078 = vunpack.c.l.b16 %v495
        %v1079 = vunpack.c.h.b16 %v495
        %v1080 = vunpack.c.l.b16 %v496
        %v1081 = vunpack.c.h.b16 %v496
        %v1082 = vunpack.c.l.b16 %v497
        %v1083 = vunpack.c.h.b16 %v497
        %v1084 = vunpack.c.l.b16 %v498
        %v1085 = vunpack.c.h.b16 %v498
        %v1086 = vunpack.c.l.b16 %v499
        %v1087 = vunpack.c.h.b16 %v499
        %v1088 = vunpack.c.l.b16 %v500
        %v1089 = vunpack.c.h.b16 %v500
        %v1090 = vunpack.c.l.b16 %v501
        %v1091 = vunpack.c.h.b16 %v501
        %v1092 = vunpack.c.l.b16 %v502
        %v1093 = vunpack.c.h.b16 %v502
        %v1094 = vunpack.c.l.b16 %v503
        %v1095 = vunpack.c.h.b16 %v503
        %v1096 = vunpack.c.l.b16 %v504
        %v1097 = vunpack.c.h.b16 %v504
        %v1098 = vunpack.c.l.b16 %v505
        %v1099 = vunpack.c.h.b16 %v505
        %v1100 = vunpack.c.l.b16 %v506
        %v1101 = vunpack.c.h.b16 %v506
        %v1102 = vunpack.c.l.b16 %v507
        %v1103 = vunpack.c.h.b16 %v507
        %v1104 = vunpack.c.l.b16 %v508
        %v1105 = vunpack.c.h.b16 %v508
        %v1106 = vunpack.c.l.b16 %v509
        %v1107 = vunpack.c.h.b16 %v509
        %v1108 = vunpack.c.l.b16 %v510
        %v1109 = vunpack.c.h.b16 %v510
        %v1110 = vunpack.c.l.b16 %v511
        %v1111 = vunpack.c.h.b16 %v511
        %v1112 = vunpack.c.l.b16 %v512
        %v1113 = vunpack.c.h.b16 %v512
        %v1114 = vunpack.c.l.b16 %v513
        %v1115 = vunpack.c.h.b16 %v513
        %v1116 = vunpack.c.l.b16 %v514
        %v1117 = vunpack.c.h.b16 %v514
        %v1118 = vunpack.c.l.b16 %v515
        %v1119 = vunpack.c.h.b16 %v515
        %v1120 = vunpack.c.l.b16 %v516
        %v1121 = vunpack.c.h.b16 %v516
        %v1122 = vunpack.c.l.b16 %v517
        %v1123 = vunpack.c.h.b16 %v517
        %v1124 = vunpack.c.l.b16 %v518
        %v1125 = vunpack.c.h.b16 %v518
        %v1126 = vunpack.c.l.b16 %v519
        %v1127 = vunpack.c.h.b16 %v519
        %v1128 = vunpack.c.l.b16 %v520
        %v1129 = vunpack.c.h.b16 %v520
        %v1130 = vunpack.c.l.b16 %v521
        %v1131 = vunpack.c.h.b16 %v521
        %v1132 = vunpack.c.l.b16 %v522
        %v1133 = vunpack.c.h.b16 %v522
        %v1134 = vunpack.c.l.b16 %v523
        %v1135 = vunpack.c.h.b16 %v523
        %v1136 = vunpack.c.l.b16 %v524
        %v1137 = vunpack.c.h.b16 %v524
        %v1138 = vunpack.c.l.b16 %v525
        %v1139 = vunpack.c.h.b16 %v525
        %v1140 = vunpack.c.l.b16 %v526
        %v1141 = vunpack.c.h.b16 %v526
        %v1142 = vunpack.c.l.b16 %v527
        %v1143 = vunpack.c.h.b16 %v527
        %v1144 = vunpack.c.l.b16 %v528
        %v1145 = vunpack.c.h.b16 %v528
        %v1146 = vunpack.c.l.b16 %v529
        %v1147 = vunpack.c.h.b16 %v529
        %v1148 = vunpack.c.l.b16 %v530
        %v1149 = vunpack.c.h.b16 %v530
        %v1150 = vunpack.c.l.b16 %v531
        %v1151 = vunpack.c.h.b16 %v531
        %v1152 = vunpack.c.l.b16 %v532
        %v1153 = vunpack.c.h.b16 %v532
        %v1154 = vunpack.c.l.b16 %v533
        %v1155 = vunpack.c.h.b16 %v533
        %v1156 = vunpack.c.l.b16 %v534
        %v1157 = vunpack.c.h.b16 %v534
        %v1158 = vunpack.c.l.b16 %v535
        %v1159 = vunpack.c.h.b16 %v535
        %v1160 = vunpack.c.l.b16 %v536
        %v1161 = vunpack.c.h.b16 %v536
        %v1162 = vunpack.c.l.b16 %v537
        %v1163 = vunpack.c.h.b16 %v537
        %v1164 = vunpack.c.l.b16 %v538
        %v1165 = vunpack.c.h.b16 %v538
        %v1166 = vunpack.c.l.b16 %v539
        %v1167 = vunpack.c.h.b16 %v539
        %v1168 = vunpack.c.l.b16 %v540
        %v1169 = vunpack.c.h.b16 %v540
        %v1170 = vunpack.c.l.b16 %v541
        %v1171 = vunpack.c.h.b16 %v541
        %v1172 = vunpack.c.l.b16 %v542
        %v1173 = vunpack.c.h.b16 %v542
        %v1174 = vunpack.c.l.b16 %v543
        %v1175 = vunpack.c.h.b16 %v543
        %v1176 = vunpack.c.l.b16 %v544
        %v1177 = vunpack.c.h.b16 %v544
        %v1178 = vunpack.c.l.b16 %v545
        %v1179 = vunpack.c.h.b16 %v545
        %v1180 = vunpack.c.l.b16 %v546
        %v1181 = vunpack.c.h.b16 %v546
        %v1182 = vunpack.c.l.b16 %v547
        %v1183 = vunpack.c.h.b16 %v547
        %v1184 = vunpack.c.l.b16 %v548
        %v1185 = vunpack.c.h.b16 %v548
        %v1186 = vunpack.c.l.b16 %v549
        %v1187 = vunpack.c.h.b16 %v549
        %v1188 = vunpack.c.l.b16 %v550
        %v1189 = vunpack.c.h.b16 %v550
        %v1190 = vunpack.c.l.b16 %v551
        %v1191 = vunpack.c.h.b16 %v551
        %v1192 = vunpack.c.l.b16 %v552
        %v1193 = vunpack.c.h.b16 %v552
        %v1194 = vunpack.c.l.b16 %v553
        %v1195 = vunpack.c.h.b16 %v553
        %v1196 = vunpack.c.l.b16 %v554
        %v1197 = vunpack.c.h.b16 %v554
        %v1198 = vunpack.c.l.b16 %v555
        %v1199 = vunpack.c.h.b16 %v555
        %v1200 = vunpack.c.l.b16 %v556
        %v1201 = vunpack.c.h.b16 %v556
        %v1202 = vunpack.c.l.b16 %v557
        %v1203 = vunpack.c.h.b16 %v557
        %v1204 = vunpack.c.l.b16 %v558
        %v1205 = vunpack.c.h.b16 %v558
        %v1206 = vunpack.c.l.b16 %v559
        %v1207 = vunpack.c.h.b16 %v559
        %v1208 = vunpack.c.l.b16 %v560
        %v1209 = vunpack.c.h.b16 %v560
        %v1210 = vunpack.c.l.b16 %v561
        %v1211 = vunpack.c.h.b16 %v561
        %v1212 = vunpack.c.l.b16 %v562
        %v1213 = vunpack.c.h.b16 %v562
        %v1214 = vunpack.c.l.b16 %v563
        %v1215 = vunpack.c.h.b16 %v563
        %v1216 = vunpack.c.l.b16 %v564
        %v1217 = vunpack.c.h.b16 %v564
        %v1218 = vunpack.c.l.b16 %v565
        %v1219 = vunpack.c.h.b16 %v565
        %v1220 = vunpack.c.l.b16 %v566
        %v1221 = vunpack.c.h.b16 %v566
        %v1222 = vunpack.c.l.b16 %v567
        %v1223 = vunpack.c.h.b16 %v567
        %v1224 = vunpack.c.l.b16 %v568
        %v1225 = vunpack.c.h.b16 %v568
        %v1226 = vunpack.c.l.b16 %v569
        %v1227 = vunpack.c.h.b16 %v569
        %v1228 = vunpack.c.l.b16 %v570
        %v1229 = vunpack.c.h.b16 %v570
        %v1230 = vunpack.c.l.b16 %v571
        %v1231 = vunpack.c.h.b16 %v571
        %v1232 = vunpack.c.l.b16 %v572
        %v1233 = vunpack.c.h.b16 %v572
        %v1234 = vunpack.c.l.b16 %v573
        %v1235 = vunpack.c.h.b16 %v573
        %v1236 = vunpack.c.l.b16 %v574
        %v1237 = vunpack.c.h.b16 %v574
        %v1238 = vunpack.c.l.b16 %v575
        %v1239 = vunpack.c.h.b16 %v575
        %v1240 = vunpack.c.l.b16 %v576
        %v1241 = vunpack.c.h.b16 %v576
        %v1242 = vunpack.c.l.b16 %v577
        %v1243 = vunpack.c.h.b16 %v577
        %v1244 = vunpack.c.l.b16 %v578
        %v1245 = vunpack.c.h.b16 %v578
        %v1246 = vunpack.c.l.b16 %v579
        %v1247 = vunpack.c.h.b16 %v579
        %v1248 = vunpack.c.l.b16 %v580
        %v1249 = vunpack.c.h.b16 %v580
        %v1250 = vunpack.c.l.b16 %v581
        %v1251 = vunpack.c.h.b16 %v581
        %v1252 = vunpack.c.l.b16 %v582
        %v1253 = vunpack.c.h.b16 %v582
        %v1254 = vunpack.c.l.b16 %v583
        %v1255 = vunpack.c.h.b16 %v583
        %v1256 = vunpack.c.l.b16 %v584
        %v1257 = vunpack.c.h.b16 %v584
        %v1258 = vunpack.c.l.b16 %v585
        %v1259 = vunpack.c.h.b16 %v585
        %v1260 = vunpack.c.l.b16 %v586
        %v1261 = vunpack.c.h.b16 %v586
        %v1262 = vunpack.c.l.b16 %v587
        %v1263 = vunpack.c.h.b16 %v587
        %v1264 = vunpack.c.l.b16 %v588
        %v1265 = vunpack.c.h.b16 %v588
        %v1266 = vunpack.c.l.b16 %v589
        %v1267 = vunpack.c.h.b16 %v589
        %v1268 = vunpack.c.l.b16 %v590
        %v1269 = vunpack.c.h.b16 %v590
        %v1270 = vunpack.c.l.b16 %v591
        %v1271 = vunpack.c.h.b16 %v591
        %v1272 = vunpack.c.l.b16 %v592
        %v1273 = vunpack.c.h.b16 %v592
        %v1274 = vunpack.c.l.b16 %v593
        %v1275 = vunpack.c.h.b16 %v593
        %v1276 = vunpack.c.l.b16 %v594
        %v1277 = vunpack.c.h.b16 %v594
        %v1278 = vunpack.c.l.b16 %v595
        %v1279 = vunpack.c.h.b16 %v595
        %v1280 = vunpack.c.l.b16 %v596
        %v1281 = vunpack.c.h.b16 %v596
        %v1282 = vunpack.c.l.b16 %v597
        %v1283 = vunpack.c.h.b16 %v597
        %v1284 = vunpack.c.l.b16 %v598
        %v1285 = vunpack.c.h.b16 %v598
        %v1286 = vunpack.c.l.b16 %v599
        %v1287 = vunpack.c.h.b16 %v599
        %v1288 = vunpack.c.l.b16 %v600
        %v1289 = vunpack.c.h.b16 %v600
        %v1290 = vunpack.c.l.b16 %v601
        %v1291 = vunpack.c.h.b16 %v601
        %v1292 = vunpack.c.l.b16 %v602
        %v1293 = vunpack.c.h.b16 %v602
        %v1294 = vunpack.c.l.b16 %v603
        %v1295 = vunpack.c.h.b16 %v603
        %v1296 = vunpack.c.l.b16 %v604
        %v1297 = vunpack.c.h.b16 %v604
        %v1298 = vunpack.c.l.b16 %v605
        %v1299 = vunpack.c.h.b16 %v605
        %v1300 = vunpack.c.l.b16 %v606
        %v1301 = vunpack.c.h.b16 %v606
        %v1302 = vunpack.c.l.b16 %v607
        %v1303 = vunpack.c.h.b16 %v607
        %v1304 = vunpack.c.l.b16 %v608
        %v1305 = vunpack.c.h.b16 %v608
        %v1306 = vunpack.c.l.b16 %v609
        %v1307 = vunpack.c.h.b16 %v609
        %v1308 = vunpack.c.l.b16 %v610
        %v1309 = vunpack.c.h.b16 %v610
        %v1310 = vunpack.c.l.b16 %v611
        %v1311 = vunpack.c.h.b16 %v611
        %v1312 = vunpack.c.l.b16 %v612
        %v1313 = vunpack.c.h.b16 %v612
        %v1314 = vunpack.c.l.b16 %v613
        %v1315 = vunpack.c.h.b16 %v613
        %v1316 = vunpack.c.l.b16 %v614
        %v1317 = vunpack.c.h.b16 %v614
        %v1318 = vunpack.c.l.b16 %v615
        %v1319 = vunpack.c.h.b16 %v615
        %v1320 = vunpack.c.l.b16 %v616
        %v1321 = vunpack.c.h.b16 %v616
        %v1322 = vunpack.c.l.b16 %v617
        %v1323 = vunpack.c.h.b16 %v617
        %v1324 = vunpack.c.l.b16 %v618
        %v1325 = vunpack.c.h.b16 %v618
        %v1326 = vunpack.c.l.b16 %v619
        %v1327 = vunpack.c.h.b16 %v619
        %v1328 = vunpack.c.l.b16 %v620
        %v1329 = vunpack.c.h.b16 %v620
        %v1330 = vunpack.c.l.b16 %v621
        %v1331 = vunpack.c.h.b16 %v621
        %v1332 = vunpack.c.l.b16 %v622
        %v1333 = vunpack.c.h.b16 %v622
        %v1334 = vunpack.c.l.b16 %v623
        %v1335 = vunpack.c.h.b16 %v623
        %v1336 = vunpack.c.l.b16 %v624
        %v1337 = vunpack.c.h.b16 %v624
        %v1338 = vunpack.c.l.b16 %v625
        %v1339 = vunpack.c.h.b16 %v625
        %v1340 = vunpack.c.l.b16 %v626
        %v1341 = vunpack.c.h.b16 %v626
        %v1342 = vunpack.c.l.b16 %v627
        %v1343 = vunpack.c.h.b16 %v627
        %v1344 = vunpack.c.l.b16 %v628
        %v1345 = vunpack.c.h.b16 %v628
        %v1346 = vunpack.c.l.b16 %v629
        %v1347 = vunpack.c.h.b16 %v629
        %v1348 = vunpack.c.l.b16 %v630
        %v1349 = vunpack.c.h.b16 %v630
        %v1350 = vunpack.c.l.b16 %v631
        %v1351 = vunpack.c.h.b16 %v631
        %v1352 = vunpack.c.l.b16 %v632
        %v1353 = vunpack.c.h.b16 %v632
        %v1354 = vunpack.c.l.b16 %v633
        %v1355 = vunpack.c.h.b16 %v633
        %v1356 = vunpack.c.l.b16 %v634
        %v1357 = vunpack.c.h.b16 %v634
        %v1358 = vunpack.c.l.b16 %v635
        %v1359 = vunpack.c.h.b16 %v635
        %v1360 = vunpack.c.l.b16 %v636
        %v1361 = vunpack.c.h.b16 %v636
        %v1362 = vunpack.c.l.b16 %v637
        %v1363 = vunpack.c.h.b16 %v637
        %v1364 = vunpack.c.l.b16 %v638
        %v1365 = vunpack.c.h.b16 %v638
        %v1366 = vunpack.c.l.b16 %v639
        %v1367 = vunpack.c.h.b16 %v639
        %v1368 = vunpack.c.l.b16 %v640
        %v1369 = vunpack.c.h.b16 %v640
        %v1370 = vunpack.c.l.b16 %v641
        %v1371 = vunpack.c.h.b16 %v641
        %v1372 = vunpack.c.l.b16 %v642
        %v1373 = vunpack.c.h.b16 %v642
        %v1374 = vunpack.c.l.b16 %v643
        %v1375 = vunpack.c.h.b16 %v643
        %v1376 = vunpack.c.l.b16 %v644
        %v1377 = vunpack.c.h.b16 %v644
        %v1378 = vunpack.c.l.b16 %v645
        %v1379 = vunpack.c.h.b16 %v645
        %v1380 = vunpack.c.l.b16 %v646
        %v1381 = vunpack.c.h.b16 %v646
        %v1382 = vunpack.c.l.b16 %v647
        %v1383 = vunpack.c.h.b16 %v647
        %v1384 = vunpack.c.l.b16 %v648
        %v1385 = vunpack.c.h.b16 %v648
        %v1386 = vunpack.c.l.b16 %v649
        %v1387 = vunpack.c.h.b16 %v649
        %v1388 = vunpack.c.l.b16 %v650
        %v1389 = vunpack.c.h.b16 %v650
        %v1390 = vunpack.c.l.b16 %v651
        %v1391 = vunpack.c.h.b16 %v651
        %v1392 = vunpack.c.l.b16 %v652
        %v1393 = vunpack.c.h.b16 %v652
        %v1394 = vunpack.c.l.b16 %v653
        %v1395 = vunpack.c.h.b16 %v653
        %v1396 = vunpack.c.l.b16 %v654
        %v1397 = vunpack.c.h.b16 %v654
        %v1398 = vunpack.c.l.b16 %v655
        %v1399 = vunpack.c.h.b16 %v655
        %v1400 = vunpack.c.l.b16 %v656
        %v1401 = vunpack.c.h.b16 %v656
        %v1402 = vunpack.c.l.b16 %v657
        %v1403 = vunpack.c.h.b16 %v657
        %v1404 = vunpack.c.l.b16 %v658
        %v1405 = vunpack.c.h.b16 %v658
        %v1406 = vunpack.c.l.b16 %v659
        %v1407 = vunpack.c.h.b16 %v659
        %v1408 = vunpack.c.l.b16 %v660
        %v1409 = vunpack.c.h.b16 %v660
        %v1410 = vunpack.c.l.b16 %v661
        %v1411 = vunpack.c.h.b16 %v661
        %v1412 = vunpack.c.l.b16 %v662
        %v1413 = vunpack.c.h.b16 %v662
        %v1414 = vunpack.c.l.b16 %v663
        %v1415 = vunpack.c.h.b16 %v663
        %v1416 = vunpack.c.l.b16 %v664
        %v1417 = vunpack.c.h.b16 %v664
        %v1418 = vunpack.c.l.b16 %v665
        %v1419 = vunpack.c.h.b16 %v665
        %v1420 = vunpack.c.l.b16 %v666
        %v1421 = vunpack.c.h.b16 %v666
        %v1422 = vunpack.c.l.b16 %v667
        %v1423 = vunpack.c.h.b16 %v667
        %v1424 = vunpack.c.l.b16 %v668
        %v1425 = vunpack.c.h.b16 %v668
        %v1426 = vunpack.c.l.b16 %v669
        %v1427 = vunpack.c.h.b16 %v669
        %v1428 = vunpack.c.l.b16 %v670
        %v1429 = vunpack.c.h.b16 %v670
        %v1430 = vunpack.c.l.b16 %v671
        %v1431 = vunpack.c.h.b16 %v671
        %v1432 = vunpack.c.l.b16 %v672
        %v1433 = vunpack.c.h.b16 %v672
        %v1434 = vunpack.c.l.b16 %v673
        %v1435 = vunpack.c.h.b16 %v673
        %v1436 = vunpack.c.l.b16 %v674
        %v1437 = vunpack.c.h.b16 %v674
        %v1438 = vunpack.c.l.b16 %v675
        %v1439 = vunpack.c.h.b16 %v675
        %v1440 = vunpack.c.l.b16 %v676
        %v1441 = vunpack.c.h.b16 %v676
        %v1442 = vunpack.c.l.b16 %v677
        %v1443 = vunpack.c.h.b16 %v677
        %v1444 = vunpack.c.l.b16 %v678
        %v1445 = vunpack.c.h.b16 %v678
        %v1446 = vunpack.c.l.b16 %v679
        %v1447 = vunpack.c.h.b16 %v679
        %v1448 = vunpack.c.l.b16 %v680
        %v1449 = vunpack.c.h.b16 %v680
        %v1450 = vunpack.c.l.b16 %v681
        %v1451 = vunpack.c.h.b16 %v681
        %v1452 = vunpack.c.l.b16 %v682
        %v1453 = vunpack.c.h.b16 %v682
        %v1454 = vunpack.c.l.b16 %v683
        %v1455 = vunpack.c.h.b16 %v683
        %v1456 = vunpack.c.l.b16 %v684
        %v1457 = vunpack.c.h.b16 %v684
        %v1458 = vunpack.c.l.b16 %v685
        %v1459 = vunpack.c.h.b16 %v685
        %v1460 = vunpack.c.l.b16 %v686
        %v1461 = vunpack.c.h.b16 %v686
        %v1462 = vunpack.c.l.b16 %v687
        %v1463 = vunpack.c.h.b16 %v687
        %v1464 = vunpack.c.l.b16 %v688
        %v1465 = vunpack.c.h.b16 %v688
        %v1466 = vunpack.c.l.b16 %v689
        %v1467 = vunpack.c.h.b16 %v689
        %v1468 = vunpack.c.l.b16 %v690
        %v1469 = vunpack.c.h.b16 %v690
        %v1470 = vunpack.c.l.b16 %v691
        %v1471 = vunpack.c.h.b16 %v691
        %v1472 = vunpack.c.l.b16 %v692
        %v1473 = vunpack.c.h.b16 %v692
        %v1474 = vunpack.c.l.b16 %v693
        %v1475 = vunpack.c.h.b16 %v693
        %v1476 = vpack.c.b16 %v972, %v964
        %v1477 = vpack.c.b16 %v973, %v965
        %v1478 = vpack.c.b16 %v974, %v966
        %v1479 = vpack.c.b16 %v975, %v967
        %v1480 = vpack.c.b16 %v976, %v968
        %v1481 = vpack.c.b16 %v977, %v969
        %v1482 = vpack.c.b16 %v978, %v970
        %v1483 = vpack.c.b16 %v979, %v971
        %v1484 = vpack.c.b16 %v988, %v980
        %v1485 = vpack.c.b16 %v989, %v981
        %v1486 = vpack.c.b16 %v990, %v982
        %v1487 = vpack.c.b16 %v991, %v983
        %v1488 = vpack.c.b16 %v992, %v984
        %v1489 = vpack.c.b16 %v993, %v985
        %v1490 = vpack.c.b16 %v994, %v986
        %v1491 = vpack.c.b16 %v995, %v987
        %v1492 = vpack.c.b16 %v1004, %v996
        %v1493 = vpack.c.b16 %v1005, %v997
        %v1494 = vpack.c.b16 %v1006, %v998
        %v1495 = vpack.c.b16 %v1007, %v999
        %v1496 = vpack.c.b16 %v1008, %v1000
        %v1497 = vpack.c.b16 %v1009, %v1001
        %v1498 = vpack.c.b16 %v1010, %v1002
        %v1499 = vpack.c.b16 %v1011, %v1003
        %v1500 = vpack.c.b16 %v1020, %v1012
        %v1501 = vpack.c.b16 %v1021, %v1013
        %v1502 = vpack.c.b16 %v1022, %v1014
        %v1503 = vpack.c.b16 %v1023, %v1015
        %v1504 = vpack.c.b16 %v1024, %v1016
        %v1505 = vpack.c.b16 %v1025, %v1017
        %v1506 = vpack.c.b16 %v1026, %v1018
        %v1507 = vpack.c.b16 %v1027, %v1019
        %v1508 = vpack.c.b16 %v1036, %v1028
        %v1509 = vpack.c.b16 %v1037, %v1029
        %v1510 = vpack.c.b16 %v1038, %v1030
        %v1511 = vpack.c.b16 %v1039, %v1031
        %v1512 = vpack.c.b16 %v1040, %v1032
        %v1513 = vpack.c.b16 %v1041, %v1033
        %v1514 = vpack.c.b16 %v1042, %v1034
        %v1515 = vpack.c.b16 %v1043, %v1035
        %v1516 = vpack.c.b16 %v1052, %v1044
        %v1517 = vpack.c.b16 %v1053, %v1045
        %v1518 = vpack.c.b16 %v1054, %v1046
        %v1519 = vpack.c.b16 %v1055, %v1047
        %v1520 = vpack.c.b16 %v1056, %v1048
        %v1521 = vpack.c.b16 %v1057, %v1049
        %v1522 = vpack.c.b16 %v1058, %v1050
        %v1523 = vpack.c.b16 %v1059, %v1051
        %v1524 = vpack.c.b16 %v1068, %v1060
        %v1525 = vpack.c.b16 %v1069, %v1061
        %v1526 = vpack.c.b16 %v1070, %v1062
        %v1527 = vpack.c.b16 %v1071, %v1063
        %v1528 = vpack.c.b16 %v1072, %v1064
        %v1529 = vpack.c.b16 %v1073, %v1065
        %v1530 = vpack.c.b16 %v1074, %v1066
        %v1531 = vpack.c.b16 %v1075, %v1067
        %v1532 = vpack.c.b16 %v1084, %v1076
        %v1533 = vpack.c.b16 %v1085, %v1077
        %v1534 = vpack.c.b16 %v1086, %v1078
        %v1535 = vpack.c.b16 %v1087, %v1079
        %v1536 = vpack.c.b16 %v1088, %v1080
        %v1537 = vpack.c.b16 %v1089, %v1081
        %v1538 = vpack.c.b16 %v1090, %v1082
        %v1539 = vpack.c.b16 %v1091, %v1083
        %v1540 = vpack.c.b16 %v1100, %v1092
        %v1541 = vpack.c.b16 %v1101, %v1093
        %v1542 = vpack.c.b16 %v1102, %v1094
        %v1543 = vpack.c.b16 %v1103, %v1095
        %v1544 = vpack.c.b16 %v1104, %v1096
        %v1545 = vpack.c.b16 %v1105, %v1097
        %v1546 = vpack.c.b16 %v1106, %v1098
        %v1547 = vpack.c.b16 %v1107, %v1099
        %v1548 = vpack.c.b16 %v1116, %v1108
        %v1549 = vpack.c.b16 %v1117, %v1109
        %v1550 = vpack.c.b16 %v1118, %v1110
        %v1551 = vpack.c.b16 %v1119, %v1111
        %v1552 = vpack.c.b16 %v1120, %v1112
        %v1553 = vpack.c.b16 %v1121, %v1113
        %v1554 = vpack.c.b16 %v1122, %v1114
        %v1555 = vpack.c.b16 %v1123, %v1115
        %v1556 = vpack.c.b16 %v1132, %v1124
        %v1557 = vpack.c.b16 %v1133, %v1125
        %v1558 = vpack.c.b16 %v1134, %v1126
        %v1559 = vpack.c.b16 %v1135, %v1127
        %v1560 = vpack.c.b16 %v1136, %v1128
        %v1561 = vpack.c.b16 %v1137, %v1129
        %v1562 = vpack.c.b16 %v1138, %v1130
        %v1563 = vpack.c.b16 %v1139, %v1131
        %v1564 = vpack.c.b16 %v1148, %v1140
        %v1565 = vpack.c.b16 %v1149, %v1141
        %v1566 = vpack.c.b16 %v1150, %v1142
        %v1567 = vpack.c.b16 %v1151, %v1143
        %v1568 = vpack.c.b16 %v1152, %v1144
        %v1569 = vpack.c.b16 %v1153, %v1145
        %v1570 = vpack.c.b16 %v1154, %v1146
        %v1571 = vpack.c.b16 %v1155, %v1147
        %v1572 = vpack.c.b16 %v1164, %v1156
        %v1573 = vpack.c.b16 %v1165, %v1157
        %v1574 = vpack.c.b16 %v1166, %v1158
        %v1575 = vpack.c.b16 %v1167, %v1159
        %v1576 = vpack.c.b16 %v1168, %v1160
        %v1577 = vpack.c.b16 %v1169, %v1161
        %v1578 = vpack.c.b16 %v1170, %v1162
        %v1579 = vpack.c.b16 %v1171, %v1163
        %v1580 = vpack.c.b16 %v1180, %v1172
        %v1581 = vpack.c.b16 %v1181, %v1173
        %v1582 = vpack.c.b16 %v1182, %v1174
        %v1583 = vpack.c.b16 %v1183, %v1175
        %v1584 = vpack.c.b16 %v1184, %v1176
        %v1585 = vpack.c.b16 %v1185, %v1177
        %v1586 = vpack.c.b16 %v1186, %v1178
        %v1587 = vpack.c.b16 %v1187, %v1179
        %v1588 = vpack.c.b16 %v1196, %v1188
        %v1589 = vpack.c.b16 %v1197, %v1189
        %v1590 = vpack.c.b16 %v1198, %v1190
        %v1591 = vpack.c.b16 %v1199, %v1191
        %v1592 = vpack.c.b16 %v1200, %v1192
        %v1593 = vpack.c.b16 %v1201, %v1193
        %v1594 = vpack.c.b16 %v1202, %v1194
        %v1595 = vpack.c.b16 %v1203, %v1195
        %v1596 = vpack.c.b16 %v1212, %v1204
        %v1597 = vpack.c.b16 %v1213, %v1205
        %v1598 = vpack.c.b16 %v1214, %v1206
        %v1599 = vpack.c.b16 %v1215, %v1207
        %v1600 = vpack.c.b16 %v1216, %v1208
        %v1601 = vpack.c.b16 %v1217, %v1209
        %v1602 = vpack.c.b16 %v1218, %v1210
        %v1603 = vpack.c.b16 %v1219, %v1211
        %v1604 = vpack.c.b16 %v1228, %v1220
        %v1605 = vpack.c.b16 %v1229, %v1221
        %v1606 = vpack.c.b16 %v1230, %v1222
        %v1607 = vpack.c.b16 %v1231, %v1223
        %v1608 = vpack.c.b16 %v1232, %v1224
        %v1609 = vpack.c.b16 %v1233, %v1225
        %v1610 = vpack.c.b16 %v1234, %v1226
        %v1611 = vpack.c.b16 %v1235, %v1227
        %v1612 = vpack.c.b16 %v1244, %v1236
        %v1613 = vpack.c.b16 %v1245, %v1237
        %v1614 = vpack.c.b16 %v1246, %v1238
        %v1615 = vpack.c.b16 %v1247, %v1239
        %v1616 = vpack.c.b16 %v1248, %v1240
        %v1617 = vpack.c.b16 %v1249, %v1241
        %v1618 = vpack.c.b16 %v1250, %v1242
        %v1619 = vpack.c.b16 %v1251, %v1243
        %v1620 = vpack.c.b16 %v1260, %v1252
        %v1621 = vpack.c.b16 %v1261, %v1253
        %v1622 = vpack.c.b16 %v1262, %v1254
        %v1623 = vpack.c.b16 %v1263, %v1255
        %v1624 = vpack.c.b16 %v1264, %v1256
        %v1625 = vpack.c.b16 %v1265, %v1257
        %v1626 = vpack.c.b16 %v1266, %v1258
        %v1627 = vpack.c.b16 %v1267, %v1259
        %v1628 = vpack.c.b16 %v1276, %v1268
        %v1629 = vpack.c.b16 %v1277, %v1269
        %v1630 = vpack.c.b16 %v1278, %v1270
        %v1631 = vpack.c.b16 %v1279, %v1271
        %v1632 = vpack.c.b16 %v1280, %v1272
        %v1633 = vpack.c.b16 %v1281, %v1273
        %v1634 = vpack.c.b16 %v1282, %v1274
        %v1635 = vpack.c.b16 %v1283, %v1275
        %v1636 = vpack.c.b16 %v1292, %v1284
        %v1637 = vpack.c.b16 %v1293, %v1285
        %v1638 = vpack.c.b16 %v1294, %v1286
        %v1639 = vpack.c.b16 %v1295, %v1287
        %v1640 = vpack.c.b16 %v1296, %v1288
        %v1641 = vpack.c.b16 %v1297, %v1289
        %v1642 = vpack.c.b16 %v1298, %v1290
        %v1643 = vpack.c.b16 %v1299, %v1291
        %v1644 = vpack.c.b16 %v1308, %v1300
        %v1645 = vpack.c.b16 %v1309, %v1301
        %v1646 = vpack.c.b16 %v1310, %v1302
        %v1647 = vpack.c.b16 %v1311, %v1303
        %v1648 = vpack.c.b16 %v1312, %v1304
        %v1649 = vpack.c.b16 %v1313, %v1305
        %v1650 = vpack.c.b16 %v1314, %v1306
        %v1651 = vpack.c.b16 %v1315, %v1307
        %v1652 = vpack.c.b16 %v1324, %v1316
        %v1653 = vpack.c.b16 %v1325, %v1317
        %v1654 = vpack.c.b16 %v1326, %v1318
        %v1655 = vpack.c.b16 %v1327, %v1319
        %v1656 = vpack.c.b16 %v1328, %v1320
        %v1657 = vpack.c.b16 %v1329, %v1321
        %v1658 = vpack.c.b16 %v1330, %v1322
        %v1659 = vpack.c.b16 %v1331, %v1323
        %v1660 = vpack.c.b16 %v1340, %v1332
        %v1661 = vpack.c.b16 %v1341, %v1333
        %v1662 = vpack.c.b16 %v1342, %v1334
        %v1663 = vpack.c.b16 %v1343, %v1335
        %v1664 = vpack.c.b16 %v1344, %v1336
        %v1665 = vpack.c.b16 %v1345, %v1337
        %v1666 = vpack.c.b16 %v1346, %v1338
        %v1667 = vpack.c.b16 %v1347, %v1339
        %v1668 = vpack.c.b16 %v1356, %v1348
        %v1669 = vpack.c.b16 %v1357, %v1349
        %v1670 = vpack.c.b16 %v1358, %v1350
        %v1671 = vpack.c.b16 %v1359, %v1351
        %v1672 = vpack.c.b16 %v1360, %v1352
        %v1673 = vpack.c.b16 %v1361, %v1353
        %v1674 = vpack.c.b16 %v1362, %v1354
        %v1675 = vpack.c.b16 %v1363, %v1355
        %v1676 = vpack.c.b16 %v1372, %v1364
        %v1677 = vpack.c.b16 %v1373, %v1365
        %v1678 = vpack.c.b16 %v1374, %v1366
        %v1679 = vpack.c.b16 %v1375, %v1367
        %v1680 = vpack.c.b16 %v1376, %v1368
        %v1681 = vpack.c.b16 %v1377, %v1369
        %v1682 = vpack.c.b16 %v1378, %v1370
        %v1683 = vpack.c.b16 %v1379, %v1371
        %v1684 = vpack.c.b16 %v1388, %v1380
        %v1685 = vpack.c.b16 %v1389, %v1381
        %v1686 = vpack.c.b16 %v1390, %v1382
        %v1687 = vpack.c.b16 %v1391, %v1383
        %v1688 = vpack.c.b16 %v1392, %v1384
        %v1689 = vpack.c.b16 %v1393, %v1385
        %v1690 = vpack.c.b16 %v1394, %v1386
        %v1691 = vpack.c.b16 %v1395, %v1387
        %v1692 = vpack.c.b16 %v1404, %v1396
        %v1693 = vpack.c.b16 %v1405, %v1397
        %v1694 = vpack.c.b16 %v1406, %v1398
        %v1695 = vpack.c.b16 %v1407, %v1399
        %v1696 = vpack.c.b16 %v1408, %v1400
        %v1697 = vpack.c.b16 %v1409, %v1401
        %v1698 = vpack.c.b16 %v1410, %v1402
        %v1699 = vpack.c.b16 %v1411, %v1403
        %v1700 = vpack.c.b16 %v1420, %v1412
        %v1701 = vpack.c.b16 %v1421, %v1413
        %v1702 = vpack.c.b16 %v1422, %v1414
        %v1703 = vpack.c.b16 %v1423, %v1415
        %v1704 = vpack.c.b16 %v1424, %v1416
        %v1705 = vpack.c.b16 %v1425, %v1417
        %v1706 = vpack.c.b16 %v1426, %v1418
        %v1707 = vpack.c.b16 %v1427, %v1419
        %v1708 = vpack.c.b16 %v1436, %v1428
        %v1709 = vpack.c.b16 %v1437, %v1429
        %v1710 = vpack.c.b16 %v1438, %v1430
        %v1711 = vpack.c.b16 %v1439, %v1431
        %v1712 = vpack.c.b16 %v1440, %v1432
        %v1713 = vpack.c.b16 %v1441, %v1433
        %v1714 = vpack.c.b16 %v1442, %v1434
        %v1715 = vpack.c.b16 %v1443, %v1435
        %v1716 = vpack.c.b16 %v1452, %v1444
        %v1717 = vpack.c.b16 %v1453, %v1445
        %v1718 = vpack.c.b16 %v1454, %v1446
        %v1719 = vpack.c.b16 %v1455, %v1447
        %v1720 = vpack.c.b16 %v1456, %v1448
        %v1721 = vpack.c.b16 %v1457, %v1449
        %v1722 = vpack.c.b16 %v1458, %v1450
        %v1723 = vpack.c.b16 %v1459, %v1451
        %v1724 = vpack.c.b16 %v1468, %v1460
        %v1725 = vpack.c.b16 %v1469, %v1461
        %v1726 = vpack.c.b16 %v1470, %v1462
        %v1727 = vpack.c.b16 %v1471, %v1463
        %v1728 = vpack.c.b16 %v1472, %v1464
        %v1729 = vpack.c.b16 %v1473, %v1465
        %v1730 = vpack.c.b16 %v1474, %v1466
        %v1731 = vpack.c.b16 %v1475, %v1467
        %1988 = vmatprep.subr.bf16.mxu0 %v1533
        %1989 = vmatpush1.bf16.msra.mxu0 %v1532
        %1990 = vmatprep.subr.bf16.mxu0 %v1525
        %1991 = vmatpush1.bf16.msra.mxu0 %v1524
        %1992 = vmatprep.subr.bf16.mxu0 %v1517
        %1993 = vmatpush1.bf16.msra.mxu0 %v1516
        %1994 = vmatprep.subr.bf16.mxu0 %v1509
        %1995 = vmatpush1.bf16.msra.mxu0 %v1508
        %1996 = vmatprep.subr.bf16.mxu0 %v1501
        %1997 = vmatpush1.bf16.msra.mxu0 %v1500
        %1998 = vmatprep.subr.bf16.mxu0 %v1493
        %1999 = vmatpush1.bf16.msra.mxu0 %v1492
        %2000 = vmatprep.subr.bf16.mxu0 %v1485
        %2001 = vmatpush1.bf16.msra.mxu0 %v1484
        %2002 = vmatprep.subr.bf16.mxu0 %v1477
        %2003 = vmatpush1.bf16.msra.mxu0 %v1476
        %2004 = vmatprep.subr.bf16.mxu0 %v1597
        %2005 = vmatpush2.bf16.msra.mxu0 %v1596
        %2006 = vmatprep.subr.bf16.mxu0 %v1589
        %2007 = vmatpush2.bf16.msra.mxu0 %v1588
        %2008 = vmatprep.subr.bf16.mxu0 %v1581
        %2009 = vmatpush2.bf16.msra.mxu0 %v1580
        %2010 = vmatprep.subr.bf16.mxu0 %v1573
        %2011 = vmatpush2.bf16.msra.mxu0 %v1572
        %2012 = vmatprep.subr.bf16.mxu0 %v1565
        %2013 = vmatpush2.bf16.msra.mxu0 %v1564
        %2014 = vmatprep.subr.bf16.mxu0 %v1557
        %2015 = vmatpush2.bf16.msra.mxu0 %v1556
        %2016 = vmatprep.subr.bf16.mxu0 %v1549
        %2017 = vmatpush2.bf16.msra.mxu0 %v1548
        %2018 = vmatprep.subr.bf16.mxu0 %v1541
        %2019 = vmatpush2.bf16.msra.mxu0 %v1540
        %2020 = vmatprep.mubr.bf16.mxu0 %v701
        %2021 = vmatmul.mubr.bf16.gmra.mxu0 %v700
        %v2022 = vpop.f32.mrf.mxu0
        %v2023 = vadd.f32 0.0, %v2022
        %v2024 = vpop.f32.mrf.mxu0
        %v2025 = vadd.f32 0.0, %v2024
        %v2026 = vpop.f32.mrf.mxu0
        %v2027 = vpop.f32.mrf.mxu0
        %2028 = vdwg.mxu0
        %2029 = vmatprep.subr.bf16.mxu0 %v1661
        %2030 = vmatpush1.bf16.msra.mxu0 %v1660
        %2031 = vmatprep.subr.bf16.mxu0 %v1653
        %2032 = vmatpush1.bf16.msra.mxu0 %v1652
        %2033 = vmatprep.subr.bf16.mxu0 %v1645
        %2034 = vmatpush1.bf16.msra.mxu0 %v1644
        %2035 = vmatprep.subr.bf16.mxu0 %v1637
        %2036 = vmatpush1.bf16.msra.mxu0 %v1636
        %2037 = vmatprep.subr.bf16.mxu0 %v1629
        %2038 = vmatpush1.bf16.msra.mxu0 %v1628
        %2039 = vmatprep.subr.bf16.mxu0 %v1621
        %2040 = vmatpush1.bf16.msra.mxu0 %v1620
        %2041 = vmatprep.subr.bf16.mxu0 %v1613
        %2042 = vmatpush1.bf16.msra.mxu0 %v1612
        %2043 = vmatprep.subr.bf16.mxu0 %v1605
        %2044 = vmatpush1.bf16.msra.mxu0 %v1604
        %2045 = vmatprep.subr.bf16.mxu0 %v1725
        %2046 = vmatpush2.bf16.msra.mxu0 %v1724
        %2047 = vmatprep.subr.bf16.mxu0 %v1717
        %2048 = vmatpush2.bf16.msra.mxu0 %v1716
        %2049 = vmatprep.subr.bf16.mxu0 %v1709
        %2050 = vmatpush2.bf16.msra.mxu0 %v1708
        %2051 = vmatprep.subr.bf16.mxu0 %v1701
        %2052 = vmatpush2.bf16.msra.mxu0 %v1700
        %2053 = vmatprep.subr.bf16.mxu0 %v1693
        %2054 = vmatpush2.bf16.msra.mxu0 %v1692
        %2055 = vmatprep.subr.bf16.mxu0 %v1685
        %2056 = vmatpush2.bf16.msra.mxu0 %v1684
        %2057 = vmatprep.subr.bf16.mxu0 %v1677
        %2058 = vmatpush2.bf16.msra.mxu0 %v1676
        %2059 = vmatprep.subr.bf16.mxu0 %v1669
        %2060 = vmatpush2.bf16.msra.mxu0 %v1668
        %2061 = vmatprep.mubr.bf16.mxu0 %v703
        %2062 = vmatmul.mubr.bf16.gmra.mxu0 %v702
        %v2063 = vpop.f32.mrf.mxu0
        %v2064 = vadd.f32 %v2023, %v2063
        %v2065 = vpop.f32.mrf.mxu0
        %v2066 = vadd.f32 %v2025, %v2065
        %v2067 = vpop.f32.mrf.mxu0
        %v2068 = vpop.f32.mrf.mxu0
        %2069 = vdwg.mxu0
        %2070 = vmatprep.subr.bf16.mxu0 %v1535
        %2071 = vmatpush1.bf16.msra.mxu0 %v1534
        %2072 = vmatprep.subr.bf16.mxu0 %v1527
        %2073 = vmatpush1.bf16.msra.mxu0 %v1526
        %2074 = vmatprep.subr.bf16.mxu0 %v1519
        %2075 = vmatpush1.bf16.msra.mxu0 %v1518
        %2076 = vmatprep.subr.bf16.mxu0 %v1511
        %2077 = vmatpush1.bf16.msra.mxu0 %v1510
        %2078 = vmatprep.subr.bf16.mxu0 %v1503
        %2079 = vmatpush1.bf16.msra.mxu0 %v1502
        %2080 = vmatprep.subr.bf16.mxu0 %v1495
        %2081 = vmatpush1.bf16.msra.mxu0 %v1494
        %2082 = vmatprep.subr.bf16.mxu0 %v1487
        %2083 = vmatpush1.bf16.msra.mxu0 %v1486
        %2084 = vmatprep.subr.bf16.mxu0 %v1479
        %2085 = vmatpush1.bf16.msra.mxu0 %v1478
        %2086 = vmatprep.subr.bf16.mxu0 %v1599
        %2087 = vmatpush2.bf16.msra.mxu0 %v1598
        %2088 = vmatprep.subr.bf16.mxu0 %v1591
        %2089 = vmatpush2.bf16.msra.mxu0 %v1590
        %2090 = vmatprep.subr.bf16.mxu0 %v1583
        %2091 = vmatpush2.bf16.msra.mxu0 %v1582
        %2092 = vmatprep.subr.bf16.mxu0 %v1575
        %2093 = vmatpush2.bf16.msra.mxu0 %v1574
        %2094 = vmatprep.subr.bf16.mxu0 %v1567
        %2095 = vmatpush2.bf16.msra.mxu0 %v1566
        %2096 = vmatprep.subr.bf16.mxu0 %v1559
        %2097 = vmatpush2.bf16.msra.mxu0 %v1558
        %2098 = vmatprep.subr.bf16.mxu0 %v1551
        %2099 = vmatpush2.bf16.msra.mxu0 %v1550
        %2100 = vmatprep.subr.bf16.mxu0 %v1543
        %2101 = vmatpush2.bf16.msra.mxu0 %v1542
        %2102 = vmatprep.mubr.bf16.mxu0 %v701
        %2103 = vmatmul.mubr.bf16.gmra.mxu0 %v700
        %v2104 = vpop.f32.mrf.mxu0
        %v2105 = vadd.f32 0.0, %v2104
        %v2106 = vpop.f32.mrf.mxu0
        %v2107 = vadd.f32 0.0, %v2106
        %v2108 = vpop.f32.mrf.mxu0
        %v2109 = vpop.f32.mrf.mxu0
        %2110 = vdwg.mxu0
        %2111 = vmatprep.subr.bf16.mxu0 %v1663
        %2112 = vmatpush1.bf16.msra.mxu0 %v1662
        %2113 = vmatprep.subr.bf16.mxu0 %v1655
        %2114 = vmatpush1.bf16.msra.mxu0 %v1654
        %2115 = vmatprep.subr.bf16.mxu0 %v1647
        %2116 = vmatpush1.bf16.msra.mxu0 %v1646
        %2117 = vmatprep.subr.bf16.mxu0 %v1639
        %2118 = vmatpush1.bf16.msra.mxu0 %v1638
        %2119 = vmatprep.subr.bf16.mxu0 %v1631
        %2120 = vmatpush1.bf16.msra.mxu0 %v1630
        %2121 = vmatprep.subr.bf16.mxu0 %v1623
        %2122 = vmatpush1.bf16.msra.mxu0 %v1622
        %2123 = vmatprep.subr.bf16.mxu0 %v1615
        %2124 = vmatpush1.bf16.msra.mxu0 %v1614
        %2125 = vmatprep.subr.bf16.mxu0 %v1607
        %2126 = vmatpush1.bf16.msra.mxu0 %v1606
        %2127 = vmatprep.subr.bf16.mxu0 %v1727
        %2128 = vmatpush2.bf16.msra.mxu0 %v1726
        %2129 = vmatprep.subr.bf16.mxu0 %v1719
        %2130 = vmatpush2.bf16.msra.mxu0 %v1718
        %2131 = vmatprep.subr.bf16.mxu0 %v1711
        %2132 = vmatpush2.bf16.msra.mxu0 %v1710
        %2133 = vmatprep.subr.bf16.mxu0 %v1703
        %2134 = vmatpush2.bf16.msra.mxu0 %v1702
        %2135 = vmatprep.subr.bf16.mxu0 %v1695
        %2136 = vmatpush2.bf16.msra.mxu0 %v1694
        %2137 = vmatprep.subr.bf16.mxu0 %v1687
        %2138 = vmatpush2.bf16.msra.mxu0 %v1686
        %2139 = vmatprep.subr.bf16.mxu0 %v1679
        %2140 = vmatpush2.bf16.msra.mxu0 %v1678
        %2141 = vmatprep.subr.bf16.mxu0 %v1671
        %2142 = vmatpush2.bf16.msra.mxu0 %v1670
        %2143 = vmatprep.mubr.bf16.mxu0 %v703
        %2144 = vmatmul.mubr.bf16.gmra.mxu0 %v702
        %v2145 = vpop.f32.mrf.mxu0
        %v2146 = vadd.f32 %v2105, %v2145
        %v2147 = vpop.f32.mrf.mxu0
        %v2148 = vadd.f32 %v2107, %v2147
        %v2149 = vpop.f32.mrf.mxu0
        %v2150 = vpop.f32.mrf.mxu0
        %2151 = vdwg.mxu0
        %2152 = vmatprep.subr.bf16.mxu0 %v1537
        %2153 = vmatpush1.bf16.msra.mxu0 %v1536
        %2154 = vmatprep.subr.bf16.mxu0 %v1529
        %2155 = vmatpush1.bf16.msra.mxu0 %v1528
        %2156 = vmatprep.subr.bf16.mxu0 %v1521
        %2157 = vmatpush1.bf16.msra.mxu0 %v1520
        %2158 = vmatprep.subr.bf16.mxu0 %v1513
        %2159 = vmatpush1.bf16.msra.mxu0 %v1512
        %2160 = vmatprep.subr.bf16.mxu0 %v1505
        %2161 = vmatpush1.bf16.msra.mxu0 %v1504
        %2162 = vmatprep.subr.bf16.mxu0 %v1497
        %2163 = vmatpush1.bf16.msra.mxu0 %v1496
        %2164 = vmatprep.subr.bf16.mxu0 %v1489
        %2165 = vmatpush1.bf16.msra.mxu0 %v1488
        %2166 = vmatprep.subr.bf16.mxu0 %v1481
        %2167 = vmatpush1.bf16.msra.mxu0 %v1480
        %2168 = vmatprep.subr.bf16.mxu0 %v1601
        %2169 = vmatpush2.bf16.msra.mxu0 %v1600
        %2170 = vmatprep.subr.bf16.mxu0 %v1593
        %2171 = vmatpush2.bf16.msra.mxu0 %v1592
        %2172 = vmatprep.subr.bf16.mxu0 %v1585
        %2173 = vmatpush2.bf16.msra.mxu0 %v1584
        %2174 = vmatprep.subr.bf16.mxu0 %v1577
        %2175 = vmatpush2.bf16.msra.mxu0 %v1576
        %2176 = vmatprep.subr.bf16.mxu0 %v1569
        %2177 = vmatpush2.bf16.msra.mxu0 %v1568
        %2178 = vmatprep.subr.bf16.mxu0 %v1561
        %2179 = vmatpush2.bf16.msra.mxu0 %v1560
        %2180 = vmatprep.subr.bf16.mxu0 %v1553
        %2181 = vmatpush2.bf16.msra.mxu0 %v1552
        %2182 = vmatprep.subr.bf16.mxu0 %v1545
        %2183 = vmatpush2.bf16.msra.mxu0 %v1544
        %2184 = vmatprep.mubr.bf16.mxu0 %v701
        %2185 = vmatmul.mubr.bf16.gmra.mxu0 %v700
        %v2186 = vpop.f32.mrf.mxu0
        %v2187 = vadd.f32 0.0, %v2186
        %v2188 = vpop.f32.mrf.mxu0
        %v2189 = vadd.f32 0.0, %v2188
        %v2190 = vpop.f32.mrf.mxu0
        %v2191 = vpop.f32.mrf.mxu0
        %2192 = vdwg.mxu0
        %2193 = vmatprep.subr.bf16.mxu0 %v1665
        %2194 = vmatpush1.bf16.msra.mxu0 %v1664
        %2195 = vmatprep.subr.bf16.mxu0 %v1657
        %2196 = vmatpush1.bf16.msra.mxu0 %v1656
        %2197 = vmatprep.subr.bf16.mxu0 %v1649
        %2198 = vmatpush1.bf16.msra.mxu0 %v1648
        %2199 = vmatprep.subr.bf16.mxu0 %v1641
        %2200 = vmatpush1.bf16.msra.mxu0 %v1640
        %2201 = vmatprep.subr.bf16.mxu0 %v1633
        %2202 = vmatpush1.bf16.msra.mxu0 %v1632
        %2203 = vmatprep.subr.bf16.mxu0 %v1625
        %2204 = vmatpush1.bf16.msra.mxu0 %v1624
        %2205 = vmatprep.subr.bf16.mxu0 %v1617
        %2206 = vmatpush1.bf16.msra.mxu0 %v1616
        %2207 = vmatprep.subr.bf16.mxu0 %v1609
        %2208 = vmatpush1.bf16.msra.mxu0 %v1608
        %2209 = vmatprep.subr.bf16.mxu0 %v1729
        %2210 = vmatpush2.bf16.msra.mxu0 %v1728
        %2211 = vmatprep.subr.bf16.mxu0 %v1721
        %2212 = vmatpush2.bf16.msra.mxu0 %v1720
        %2213 = vmatprep.subr.bf16.mxu0 %v1713
        %2214 = vmatpush2.bf16.msra.mxu0 %v1712
        %2215 = vmatprep.subr.bf16.mxu0 %v1705
        %2216 = vmatpush2.bf16.msra.mxu0 %v1704
        %2217 = vmatprep.subr.bf16.mxu0 %v1697
        %2218 = vmatpush2.bf16.msra.mxu0 %v1696
        %2219 = vmatprep.subr.bf16.mxu0 %v1689
        %2220 = vmatpush2.bf16.msra.mxu0 %v1688
        %2221 = vmatprep.subr.bf16.mxu0 %v1681
        %2222 = vmatpush2.bf16.msra.mxu0 %v1680
        %2223 = vmatprep.subr.bf16.mxu0 %v1673
        %2224 = vmatpush2.bf16.msra.mxu0 %v1672
        %2225 = vmatprep.mubr.bf16.mxu0 %v703
        %2226 = vmatmul.mubr.bf16.gmra.mxu0 %v702
        %v2227 = vpop.f32.mrf.mxu0
        %v2228 = vadd.f32 %v2187, %v2227
        %v2229 = vpop.f32.mrf.mxu0
        %v2230 = vadd.f32 %v2189, %v2229
        %v2231 = vpop.f32.mrf.mxu0
        %v2232 = vpop.f32.mrf.mxu0
        %2233 = vdwg.mxu0
        %2234 = vmatprep.subr.bf16.mxu0 %v1539
        %2235 = vmatpush1.bf16.msra.mxu0 %v1538
        %2236 = vmatprep.subr.bf16.mxu0 %v1531
        %2237 = vmatpush1.bf16.msra.mxu0 %v1530
        %2238 = vmatprep.subr.bf16.mxu0 %v1523
        %2239 = vmatpush1.bf16.msra.mxu0 %v1522
        %2240 = vmatprep.subr.bf16.mxu0 %v1515
        %2241 = vmatpush1.bf16.msra.mxu0 %v1514
        %2242 = vmatprep.subr.bf16.mxu0 %v1507
        %2243 = vmatpush1.bf16.msra.mxu0 %v1506
        %2244 = vmatprep.subr.bf16.mxu0 %v1499
        %2245 = vmatpush1.bf16.msra.mxu0 %v1498
        %2246 = vmatprep.subr.bf16.mxu0 %v1491
        %2247 = vmatpush1.bf16.msra.mxu0 %v1490
        %2248 = vmatprep.subr.bf16.mxu0 %v1483
        %2249 = vmatpush1.bf16.msra.mxu0 %v1482
        %2250 = vmatprep.subr.bf16.mxu0 %v1603
        %2251 = vmatpush2.bf16.msra.mxu0 %v1602
        %2252 = vmatprep.subr.bf16.mxu0 %v1595
        %2253 = vmatpush2.bf16.msra.mxu0 %v1594
        %2254 = vmatprep.subr.bf16.mxu0 %v1587
        %2255 = vmatpush2.bf16.msra.mxu0 %v1586
        %2256 = vmatprep.subr.bf16.mxu0 %v1579
        %2257 = vmatpush2.bf16.msra.mxu0 %v1578
        %2258 = vmatprep.subr.bf16.mxu0 %v1571
        %2259 = vmatpush2.bf16.msra.mxu0 %v1570
        %2260 = vmatprep.subr.bf16.mxu0 %v1563
        %2261 = vmatpush2.bf16.msra.mxu0 %v1562
        %2262 = vmatprep.subr.bf16.mxu0 %v1555
        %2263 = vmatpush2.bf16.msra.mxu0 %v1554
        %2264 = vmatprep.subr.bf16.mxu0 %v1547
        %2265 = vmatpush2.bf16.msra.mxu0 %v1546
        %2266 = vmatprep.mubr.bf16.mxu0 %v701
        %2267 = vmatmul.mubr.bf16.gmra.mxu0 %v700
        %v2268 = vpop.f32.mrf.mxu0
        %v2269 = vadd.f32 0.0, %v2268
        %v2270 = vpop.f32.mrf.mxu0
        %v2271 = vadd.f32 0.0, %v2270
        %v2272 = vpop.f32.mrf.mxu0
        %v2273 = vpop.f32.mrf.mxu0
        %2274 = vdwg.mxu0
        %2275 = vmatprep.subr.bf16.mxu0 %v1667
        %2276 = vmatpush1.bf16.msra.mxu0 %v1666
        %2277 = vmatprep.subr.bf16.mxu0 %v1659
        %2278 = vmatpush1.bf16.msra.mxu0 %v1658
        %2279 = vmatprep.subr.bf16.mxu0 %v1651
        %2280 = vmatpush1.bf16.msra.mxu0 %v1650
        %2281 = vmatprep.subr.bf16.mxu0 %v1643
        %2282 = vmatpush1.bf16.msra.mxu0 %v1642
        %2283 = vmatprep.subr.bf16.mxu0 %v1635
        %2284 = vmatpush1.bf16.msra.mxu0 %v1634
        %2285 = vmatprep.subr.bf16.mxu0 %v1627
        %2286 = vmatpush1.bf16.msra.mxu0 %v1626
        %2287 = vmatprep.subr.bf16.mxu0 %v1619
        %2288 = vmatpush1.bf16.msra.mxu0 %v1618
        %2289 = vmatprep.subr.bf16.mxu0 %v1611
        %2290 = vmatpush1.bf16.msra.mxu0 %v1610
        %2291 = vmatprep.subr.bf16.mxu0 %v1731
        %2292 = vmatpush2.bf16.msra.mxu0 %v1730
        %2293 = vmatprep.subr.bf16.mxu0 %v1723
        %2294 = vmatpush2.bf16.msra.mxu0 %v1722
        %2295 = vmatprep.subr.bf16.mxu0 %v1715
        %2296 = vmatpush2.bf16.msra.mxu0 %v1714
        %2297 = vmatprep.subr.bf16.mxu0 %v1707
        %2298 = vmatpush2.bf16.msra.mxu0 %v1706
        %2299 = vmatprep.subr.bf16.mxu0 %v1699
        %2300 = vmatpush2.bf16.msra.mxu0 %v1698
        %2301 = vmatprep.subr.bf16.mxu0 %v1691
        %2302 = vmatpush2.bf16.msra.mxu0 %v1690
        %2303 = vmatprep.subr.bf16.mxu0 %v1683
        %2304 = vmatpush2.bf16.msra.mxu0 %v1682
        %2305 = vmatprep.subr.bf16.mxu0 %v1675
        %2306 = vmatpush2.bf16.msra.mxu0 %v1674
        %2307 = vmatprep.mubr.bf16.mxu0 %v703
        %2308 = vmatmul.mubr.bf16.gmra.mxu0 %v702
        %v2309 = vpop.f32.mrf.mxu0
        %v2310 = vadd.f32 %v2269, %v2309
        %v2311 = vpop.f32.mrf.mxu0
        %v2312 = vadd.f32 %v2271, %v2311
        %v2313 = vpop.f32.mrf.mxu0
        %v2314 = vpop.f32.mrf.mxu0
        %2315 = vdwg.mxu0
        %v2316 = vadd.f32 %v428, %v2064
        %v2317 = vadd.f32 %v429, %v2066
        %v2318 = vadd.f32 %v430, %v2146
        %v2319 = vadd.f32 %v431, %v2148
        %v2320 = vadd.f32 %v432, %v2228
        %v2321 = vadd.f32 %v433, %v2230
        %v2322 = vadd.f32 %v434, %v2310
        %v2323 = vadd.f32 %v435, %v2312
        %2324 = vst [vmem:[#allocation2] sm:$0xff] %v2316
        %2325 = vst [vmem:[#allocation2 + $0x8] sm:$0xff] %v2317
        %2326 = vst [vmem:[#allocation2 + $0x10] sm:$0xff] %v2318
        %2327 = vst [vmem:[#allocation2 + $0x18] sm:$0xff] %v2319
        %2328 = vst [vmem:[#allocation2 + $0x20] sm:$0xff] %v2320
        %2329 = vst [vmem:[#allocation2 + $0x28] sm:$0xff] %v2321
        %2330 = vst [vmem:[#allocation2 + $0x30] sm:$0xff] %v2322
        %2331 = vst [vmem:[#allocation2 + $0x38] sm:$0xff] %v2323
        %p2332 = scmp.eq.s32.totalorder %s32, 1
        // Predicated region
        $region77: #{tpu_custom_call.1} parent=47 // pred_check
          %p2333 = pneg %p2332
        $region78: #{tpu_custom_call.1} parent=47 // pred_check_branch
          %2335 = sbr.rel (%p2333) target = $region80
        $region79: #{tpu_custom_call.1} parent=47 // pred_region
          %v2336 = vld [vmem:[#allocation2] sm:$0xff]
          %v2337 = vld [vmem:[#allocation2 + $0x8] sm:$0xff]
          %v2338 = vld [vmem:[#allocation2 + $0x10] sm:$0xff]
          %v2339 = vld [vmem:[#allocation2 + $0x18] sm:$0xff]
          %v2340 = vld [vmem:[#allocation2 + $0x20] sm:$0xff]
          %v2341 = vld [vmem:[#allocation2 + $0x28] sm:$0xff]
          %v2342 = vld [vmem:[#allocation2 + $0x30] sm:$0xff]
          %v2343 = vld [vmem:[#allocation2 + $0x38] sm:$0xff]
          %v2344 = vld [vmem:[#allocation8] sm:$0xff]
          %v2346 = vlaneseq
          %v2347 = vshrl.u32 %v2346, 7
          %v2348 = vsub.s32 0, %v2347
          %v2349 = vrot.slane %v2344, %v2348
          %v2350 = vlaneseq
          %v2351 = vshrl.u32 %v2350, 7
          %v2352 = vsub.s32 1, %v2351
          %v2353 = vrot.slane %v2344, %v2352
          %v2354 = vlaneseq
          %v2355 = vshrl.u32 %v2354, 7
          %v2356 = vsub.s32 2, %v2355
          %v2357 = vrot.slane %v2344, %v2356
          %v2358 = vlaneseq
          %v2359 = vshrl.u32 %v2358, 7
          %v2360 = vsub.s32 3, %v2359
          %v2361 = vrot.slane %v2344, %v2360
          %v2362 = vlaneseq
          %v2363 = vshrl.u32 %v2362, 7
          %v2364 = vsub.s32 4, %v2363
          %v2365 = vrot.slane %v2344, %v2364
          %v2366 = vlaneseq
          %v2367 = vshrl.u32 %v2366, 7
          %v2368 = vsub.s32 5, %v2367
          %v2369 = vrot.slane %v2344, %v2368
          %v2370 = vlaneseq
          %v2371 = vshrl.u32 %v2370, 7
          %v2372 = vsub.s32 6, %v2371
          %v2373 = vrot.slane %v2344, %v2372
          %v2374 = vlaneseq
          %v2375 = vshrl.u32 %v2374, 7
          %v2376 = vsub.s32 7, %v2375
          %v2377 = vrot.slane %v2344, %v2376
          %v2386 = vadd.f32 %v2336, %v2349
          %v2387 = vadd.f32 %v2337, %v2353
          %v2388 = vadd.f32 %v2338, %v2357
          %v2389 = vadd.f32 %v2339, %v2361
          %v2390 = vadd.f32 %v2340, %v2365
          %v2391 = vadd.f32 %v2341, %v2369
          %v2392 = vadd.f32 %v2342, %v2373
          %v2393 = vadd.f32 %v2343, %v2377
          %v2394 = vld [vmem:[#allocation9] sm:$0xff]
          %v2395 = vld [vmem:[#allocation9 + $0x8] sm:$0xff]
          %v2396 = vld [vmem:[#allocation9 + $0x10] sm:$0xff]
          %v2397 = vld [vmem:[#allocation9 + $0x18] sm:$0xff]
          %v2398 = vld [vmem:[#allocation9 + $0x20] sm:$0xff]
          %v2399 = vld [vmem:[#allocation9 + $0x28] sm:$0xff]
          %v2400 = vld [vmem:[#allocation9 + $0x30] sm:$0xff]
          %v2401 = vld [vmem:[#allocation9 + $0x38] sm:$0xff]
          %v2402 = vld [vmem:[#allocation9 + $0x40] sm:$0xff]
          %v2403 = vld [vmem:[#allocation9 + $0x48] sm:$0xff]
          %v2404 = vld [vmem:[#allocation9 + $0x50] sm:$0xff]
          %v2405 = vld [vmem:[#allocation9 + $0x58] sm:$0xff]
          %v2406 = vld [vmem:[#allocation9 + $0x60] sm:$0xff]
          %v2407 = vld [vmem:[#allocation9 + $0x68] sm:$0xff]
          %v2408 = vld [vmem:[#allocation9 + $0x70] sm:$0xff]
          %v2409 = vld [vmem:[#allocation9 + $0x78] sm:$0xff]
          %v2410 = vld [vmem:[#allocation9 + $0x80] sm:$0xff]
          %v2411 = vld [vmem:[#allocation9 + $0x88] sm:$0xff]
          %v2412 = vld [vmem:[#allocation9 + $0x90] sm:$0xff]
          %v2413 = vld [vmem:[#allocation9 + $0x98] sm:$0xff]
          %v2414 = vld [vmem:[#allocation9 + $0xa0] sm:$0xff]
          %v2415 = vld [vmem:[#allocation9 + $0xa8] sm:$0xff]
          %v2416 = vld [vmem:[#allocation9 + $0xb0] sm:$0xff]
          %v2417 = vld [vmem:[#allocation9 + $0xb8] sm:$0xff]
          %v2418 = vld [vmem:[#allocation9 + $0xc0] sm:$0xff]
          %v2419 = vld [vmem:[#allocation9 + $0xc8] sm:$0xff]
          %v2420 = vld [vmem:[#allocation9 + $0xd0] sm:$0xff]
          %v2421 = vld [vmem:[#allocation9 + $0xd8] sm:$0xff]
          %v2422 = vld [vmem:[#allocation9 + $0xe0] sm:$0xff]
          %v2423 = vld [vmem:[#allocation9 + $0xe8] sm:$0xff]
          %v2424 = vld [vmem:[#allocation9 + $0xf0] sm:$0xff]
          %v2425 = vld [vmem:[#allocation9 + $0xf8] sm:$0xff]
          %v2426 = vld [vmem:[#allocation9 + $0x100] sm:$0xff]
          %v2427 = vld [vmem:[#allocation9 + $0x108] sm:$0xff]
          %v2428 = vld [vmem:[#allocation9 + $0x110] sm:$0xff]
          %v2429 = vld [vmem:[#allocation9 + $0x118] sm:$0xff]
          %v2430 = vld [vmem:[#allocation9 + $0x120] sm:$0xff]
          %v2431 = vld [vmem:[#allocation9 + $0x128] sm:$0xff]
          %v2432 = vld [vmem:[#allocation9 + $0x130] sm:$0xff]
          %v2433 = vld [vmem:[#allocation9 + $0x138] sm:$0xff]
          %v2434 = vld [vmem:[#allocation9 + $0x140] sm:$0xff]
          %v2435 = vld [vmem:[#allocation9 + $0x148] sm:$0xff]
          %v2436 = vld [vmem:[#allocation9 + $0x150] sm:$0xff]
          %v2437 = vld [vmem:[#allocation9 + $0x158] sm:$0xff]
          %v2438 = vld [vmem:[#allocation9 + $0x160] sm:$0xff]
          %v2439 = vld [vmem:[#allocation9 + $0x168] sm:$0xff]
          %v2440 = vld [vmem:[#allocation9 + $0x170] sm:$0xff]
          %v2441 = vld [vmem:[#allocation9 + $0x178] sm:$0xff]
          %v2442 = vld [vmem:[#allocation9 + $0x180] sm:$0xff]
          %v2443 = vld [vmem:[#allocation9 + $0x188] sm:$0xff]
          %v2444 = vld [vmem:[#allocation9 + $0x190] sm:$0xff]
          %v2445 = vld [vmem:[#allocation9 + $0x198] sm:$0xff]
          %v2446 = vld [vmem:[#allocation9 + $0x1a0] sm:$0xff]
          %v2447 = vld [vmem:[#allocation9 + $0x1a8] sm:$0xff]
          %v2448 = vld [vmem:[#allocation9 + $0x1b0] sm:$0xff]
          %v2449 = vld [vmem:[#allocation9 + $0x1b8] sm:$0xff]
          %v2450 = vld [vmem:[#allocation9 + $0x1c0] sm:$0xff]
          %v2451 = vld [vmem:[#allocation9 + $0x1c8] sm:$0xff]
          %v2452 = vld [vmem:[#allocation9 + $0x1d0] sm:$0xff]
          %v2453 = vld [vmem:[#allocation9 + $0x1d8] sm:$0xff]
          %v2454 = vld [vmem:[#allocation9 + $0x1e0] sm:$0xff]
          %v2455 = vld [vmem:[#allocation9 + $0x1e8] sm:$0xff]
          %v2456 = vld [vmem:[#allocation9 + $0x1f0] sm:$0xff]
          %v2457 = vld [vmem:[#allocation9 + $0x1f8] sm:$0xff]
          %v2458 = vld [vmem:[#allocation9 + $0x200] sm:$0xff]
          %v2459 = vld [vmem:[#allocation9 + $0x208] sm:$0xff]
          %v2460 = vld [vmem:[#allocation9 + $0x210] sm:$0xff]
          %v2461 = vld [vmem:[#allocation9 + $0x218] sm:$0xff]
          %v2462 = vld [vmem:[#allocation9 + $0x220] sm:$0xff]
          %v2463 = vld [vmem:[#allocation9 + $0x228] sm:$0xff]
          %v2464 = vld [vmem:[#allocation9 + $0x230] sm:$0xff]
          %v2465 = vld [vmem:[#allocation9 + $0x238] sm:$0xff]
          %v2466 = vld [vmem:[#allocation9 + $0x240] sm:$0xff]
          %v2467 = vld [vmem:[#allocation9 + $0x248] sm:$0xff]
          %v2468 = vld [vmem:[#allocation9 + $0x250] sm:$0xff]
          %v2469 = vld [vmem:[#allocation9 + $0x258] sm:$0xff]
          %v2470 = vld [vmem:[#allocation9 + $0x260] sm:$0xff]
          %v2471 = vld [vmem:[#allocation9 + $0x268] sm:$0xff]
          %v2472 = vld [vmem:[#allocation9 + $0x270] sm:$0xff]
          %v2473 = vld [vmem:[#allocation9 + $0x278] sm:$0xff]
          %v2474 = vld [vmem:[#allocation9 + $0x280] sm:$0xff]
          %v2475 = vld [vmem:[#allocation9 + $0x288] sm:$0xff]
          %v2476 = vld [vmem:[#allocation9 + $0x290] sm:$0xff]
          %v2477 = vld [vmem:[#allocation9 + $0x298] sm:$0xff]
          %v2478 = vld [vmem:[#allocation9 + $0x2a0] sm:$0xff]
          %v2479 = vld [vmem:[#allocation9 + $0x2a8] sm:$0xff]
          %v2480 = vld [vmem:[#allocation9 + $0x2b0] sm:$0xff]
          %v2481 = vld [vmem:[#allocation9 + $0x2b8] sm:$0xff]
          %v2482 = vld [vmem:[#allocation9 + $0x2c0] sm:$0xff]
          %v2483 = vld [vmem:[#allocation9 + $0x2c8] sm:$0xff]
          %v2484 = vld [vmem:[#allocation9 + $0x2d0] sm:$0xff]
          %v2485 = vld [vmem:[#allocation9 + $0x2d8] sm:$0xff]
          %v2486 = vld [vmem:[#allocation9 + $0x2e0] sm:$0xff]
          %v2487 = vld [vmem:[#allocation9 + $0x2e8] sm:$0xff]
          %v2488 = vld [vmem:[#allocation9 + $0x2f0] sm:$0xff]
          %v2489 = vld [vmem:[#allocation9 + $0x2f8] sm:$0xff]
          %v2490 = vld [vmem:[#allocation9 + $0x300] sm:$0xff]
          %v2491 = vld [vmem:[#allocation9 + $0x308] sm:$0xff]
          %v2492 = vld [vmem:[#allocation9 + $0x310] sm:$0xff]
          %v2493 = vld [vmem:[#allocation9 + $0x318] sm:$0xff]
          %v2494 = vld [vmem:[#allocation9 + $0x320] sm:$0xff]
          %v2495 = vld [vmem:[#allocation9 + $0x328] sm:$0xff]
          %v2496 = vld [vmem:[#allocation9 + $0x330] sm:$0xff]
          %v2497 = vld [vmem:[#allocation9 + $0x338] sm:$0xff]
          %v2498 = vld [vmem:[#allocation9 + $0x340] sm:$0xff]
          %v2499 = vld [vmem:[#allocation9 + $0x348] sm:$0xff]
          %v2500 = vld [vmem:[#allocation9 + $0x350] sm:$0xff]
          %v2501 = vld [vmem:[#allocation9 + $0x358] sm:$0xff]
          %v2502 = vld [vmem:[#allocation9 + $0x360] sm:$0xff]
          %v2503 = vld [vmem:[#allocation9 + $0x368] sm:$0xff]
          %v2504 = vld [vmem:[#allocation9 + $0x370] sm:$0xff]
          %v2505 = vld [vmem:[#allocation9 + $0x378] sm:$0xff]
          %v2506 = vld [vmem:[#allocation9 + $0x380] sm:$0xff]
          %v2507 = vld [vmem:[#allocation9 + $0x388] sm:$0xff]
          %v2508 = vld [vmem:[#allocation9 + $0x390] sm:$0xff]
          %v2509 = vld [vmem:[#allocation9 + $0x398] sm:$0xff]
          %v2510 = vld [vmem:[#allocation9 + $0x3a0] sm:$0xff]
          %v2511 = vld [vmem:[#allocation9 + $0x3a8] sm:$0xff]
          %v2512 = vld [vmem:[#allocation9 + $0x3b0] sm:$0xff]
          %v2513 = vld [vmem:[#allocation9 + $0x3b8] sm:$0xff]
          %v2514 = vld [vmem:[#allocation9 + $0x3c0] sm:$0xff]
          %v2515 = vld [vmem:[#allocation9 + $0x3c8] sm:$0xff]
          %v2516 = vld [vmem:[#allocation9 + $0x3d0] sm:$0xff]
          %v2517 = vld [vmem:[#allocation9 + $0x3d8] sm:$0xff]
          %v2518 = vld [vmem:[#allocation9 + $0x3e0] sm:$0xff]
          %v2519 = vld [vmem:[#allocation9 + $0x3e8] sm:$0xff]
          %v2520 = vld [vmem:[#allocation9 + $0x3f0] sm:$0xff]
          %v2521 = vld [vmem:[#allocation9 + $0x3f8] sm:$0xff]
          %v2522 = vld [vmem:[%s414] sm:$0xff]
          %v2523 = vld [vmem:[#allocation11] sm:$0x1]
          %2525 = vset.pattern.permute.xlu0 0
          %2526 = vperm.xlu0 %2525, %v2522
          %v2527 = vpop.permute.xlu0 %2526
          %v2530 = vlaneseq
          %v2531 = vshrl.u32 %v2530, 7
          %v2532 = vsub.s32 0, %v2531
          %v2533 = vrot.slane %v2523, %v2532
          %v2535 = vmul.f32 %v2527, %v2533
          %2536 = vmatprep.subr.mxu0 0.0
          %2537 = vmatpush1.msra.mxu0 %v2409
          %2538 = vmatprep.subr.mxu0 0.0
          %2539 = vmatpush1.msra.mxu0 %v2408
          %2540 = vmatprep.subr.mxu0 0.0
          %2541 = vmatpush1.msra.mxu0 %v2407
          %2542 = vmatprep.subr.mxu0 0.0
          %2543 = vmatpush1.msra.mxu0 %v2406
          %2544 = vmatprep.subr.mxu0 0.0
          %2545 = vmatpush1.msra.mxu0 %v2405
          %2546 = vmatprep.subr.mxu0 0.0
          %2547 = vmatpush1.msra.mxu0 %v2404
          %2548 = vmatprep.subr.mxu0 0.0
          %2549 = vmatpush1.msra.mxu0 %v2403
          %2550 = vmatprep.subr.mxu0 0.0
          %2551 = vmatpush1.msra.mxu0 %v2402
          %2552 = vmatprep.subr.mxu0 0.0
          %2553 = vmatpush1.msra.mxu0 %v2401
          %2554 = vmatprep.subr.mxu0 0.0
          %2555 = vmatpush1.msra.mxu0 %v2400
          %2556 = vmatprep.subr.mxu0 0.0
          %2557 = vmatpush1.msra.mxu0 %v2399
          %2558 = vmatprep.subr.mxu0 0.0
          %2559 = vmatpush1.msra.mxu0 %v2398
          %2560 = vmatprep.subr.mxu0 0.0
          %2561 = vmatpush1.msra.mxu0 %v2397
          %2562 = vmatprep.subr.mxu0 0.0
          %2563 = vmatpush1.msra.mxu0 %v2396
          %2564 = vmatprep.subr.mxu0 0.0
          %2565 = vmatpush1.msra.mxu0 %v2395
          %2566 = vmatprep.subr.mxu0 0.0
          %2567 = vmatpush1.msra.mxu0 %v2394
          %2568 = vmatprep.subr.mxu0 0.0
          %2569 = vmatpush2.msra.mxu0 %v2425
          %2570 = vmatprep.subr.mxu0 0.0
          %2571 = vmatpush2.msra.mxu0 %v2424
          %2572 = vmatprep.subr.mxu0 0.0
          %2573 = vmatpush2.msra.mxu0 %v2423
          %2574 = vmatprep.subr.mxu0 0.0
          %2575 = vmatpush2.msra.mxu0 %v2422
          %2576 = vmatprep.subr.mxu0 0.0
          %2577 = vmatpush2.msra.mxu0 %v2421
          %2578 = vmatprep.subr.mxu0 0.0
          %2579 = vmatpush2.msra.mxu0 %v2420
          %2580 = vmatprep.subr.mxu0 0.0
          %2581 = vmatpush2.msra.mxu0 %v2419
          %2582 = vmatprep.subr.mxu0 0.0
          %2583 = vmatpush2.msra.mxu0 %v2418
          %2584 = vmatprep.subr.mxu0 0.0
          %2585 = vmatpush2.msra.mxu0 %v2417
          %2586 = vmatprep.subr.mxu0 0.0
          %2587 = vmatpush2.msra.mxu0 %v2416
          %2588 = vmatprep.subr.mxu0 0.0
          %2589 = vmatpush2.msra.mxu0 %v2415
          %2590 = vmatprep.subr.mxu0 0.0
          %2591 = vmatpush2.msra.mxu0 %v2414
          %2592 = vmatprep.subr.mxu0 0.0
          %2593 = vmatpush2.msra.mxu0 %v2413
          %2594 = vmatprep.subr.mxu0 0.0
          %2595 = vmatpush2.msra.mxu0 %v2412
          %2596 = vmatprep.subr.mxu0 0.0
          %2597 = vmatpush2.msra.mxu0 %v2411
          %2598 = vmatprep.subr.mxu0 0.0
          %2599 = vmatpush2.msra.mxu0 %v2410
          %2600 = vmatprep.mubr.f32.mxu0 %v2387
          %2601 = vmatmul.mubr.f32.gmra.mxu0 %v2386
          %v2602 = vpop.f32.mrf.mxu0
          %v2603 = vadd.f32 %v2535, %v2602
          %v2604 = vpop.f32.mrf.mxu0
          %2605 = vdwg.mxu0
          %2606 = vmatprep.subr.mxu0 0.0
          %2607 = vmatpush1.msra.mxu0 %v2441
          %2608 = vmatprep.subr.mxu0 0.0
          %2609 = vmatpush1.msra.mxu0 %v2440
          %2610 = vmatprep.subr.mxu0 0.0
          %2611 = vmatpush1.msra.mxu0 %v2439
          %2612 = vmatprep.subr.mxu0 0.0
          %2613 = vmatpush1.msra.mxu0 %v2438
          %2614 = vmatprep.subr.mxu0 0.0
          %2615 = vmatpush1.msra.mxu0 %v2437
          %2616 = vmatprep.subr.mxu0 0.0
          %2617 = vmatpush1.msra.mxu0 %v2436
          %2618 = vmatprep.subr.mxu0 0.0
          %2619 = vmatpush1.msra.mxu0 %v2435
          %2620 = vmatprep.subr.mxu0 0.0
          %2621 = vmatpush1.msra.mxu0 %v2434
          %2622 = vmatprep.subr.mxu0 0.0
          %2623 = vmatpush1.msra.mxu0 %v2433
          %2624 = vmatprep.subr.mxu0 0.0
          %2625 = vmatpush1.msra.mxu0 %v2432
          %2626 = vmatprep.subr.mxu0 0.0
          %2627 = vmatpush1.msra.mxu0 %v2431
          %2628 = vmatprep.subr.mxu0 0.0
          %2629 = vmatpush1.msra.mxu0 %v2430
          %2630 = vmatprep.subr.mxu0 0.0
          %2631 = vmatpush1.msra.mxu0 %v2429
          %2632 = vmatprep.subr.mxu0 0.0
          %2633 = vmatpush1.msra.mxu0 %v2428
          %2634 = vmatprep.subr.mxu0 0.0
          %2635 = vmatpush1.msra.mxu0 %v2427
          %2636 = vmatprep.subr.mxu0 0.0
          %2637 = vmatpush1.msra.mxu0 %v2426
          %2638 = vmatprep.subr.mxu0 0.0
          %2639 = vmatpush2.msra.mxu0 %v2457
          %2640 = vmatprep.subr.mxu0 0.0
          %2641 = vmatpush2.msra.mxu0 %v2456
          %2642 = vmatprep.subr.mxu0 0.0
          %2643 = vmatpush2.msra.mxu0 %v2455
          %2644 = vmatprep.subr.mxu0 0.0
          %2645 = vmatpush2.msra.mxu0 %v2454
          %2646 = vmatprep.subr.mxu0 0.0
          %2647 = vmatpush2.msra.mxu0 %v2453
          %2648 = vmatprep.subr.mxu0 0.0
          %2649 = vmatpush2.msra.mxu0 %v2452
          %2650 = vmatprep.subr.mxu0 0.0
          %2651 = vmatpush2.msra.mxu0 %v2451
          %2652 = vmatprep.subr.mxu0 0.0
          %2653 = vmatpush2.msra.mxu0 %v2450
          %2654 = vmatprep.subr.mxu0 0.0
          %2655 = vmatpush2.msra.mxu0 %v2449
          %2656 = vmatprep.subr.mxu0 0.0
          %2657 = vmatpush2.msra.mxu0 %v2448
          %2658 = vmatprep.subr.mxu0 0.0
          %2659 = vmatpush2.msra.mxu0 %v2447
          %2660 = vmatprep.subr.mxu0 0.0
          %2661 = vmatpush2.msra.mxu0 %v2446
          %2662 = vmatprep.subr.mxu0 0.0
          %2663 = vmatpush2.msra.mxu0 %v2445
          %2664 = vmatprep.subr.mxu0 0.0
          %2665 = vmatpush2.msra.mxu0 %v2444
          %2666 = vmatprep.subr.mxu0 0.0
          %2667 = vmatpush2.msra.mxu0 %v2443
          %2668 = vmatprep.subr.mxu0 0.0
          %2669 = vmatpush2.msra.mxu0 %v2442
          %2670 = vmatprep.mubr.f32.mxu0 %v2389
          %2671 = vmatmul.mubr.f32.gmra.mxu0 %v2388
          %v2672 = vpop.f32.mrf.mxu0
          %v2673 = vadd.f32 %v2603, %v2672
          %v2674 = vpop.f32.mrf.mxu0
          %2675 = vdwg.mxu0
          %2676 = vmatprep.subr.mxu0 0.0
          %2677 = vmatpush1.msra.mxu0 %v2473
          %2678 = vmatprep.subr.mxu0 0.0
          %2679 = vmatpush1.msra.mxu0 %v2472
          %2680 = vmatprep.subr.mxu0 0.0
          %2681 = vmatpush1.msra.mxu0 %v2471
          %2682 = vmatprep.subr.mxu0 0.0
          %2683 = vmatpush1.msra.mxu0 %v2470
          %2684 = vmatprep.subr.mxu0 0.0
          %2685 = vmatpush1.msra.mxu0 %v2469
          %2686 = vmatprep.subr.mxu0 0.0
          %2687 = vmatpush1.msra.mxu0 %v2468
          %2688 = vmatprep.subr.mxu0 0.0
          %2689 = vmatpush1.msra.mxu0 %v2467
          %2690 = vmatprep.subr.mxu0 0.0
          %2691 = vmatpush1.msra.mxu0 %v2466
          %2692 = vmatprep.subr.mxu0 0.0
          %2693 = vmatpush1.msra.mxu0 %v2465
          %2694 = vmatprep.subr.mxu0 0.0
          %2695 = vmatpush1.msra.mxu0 %v2464
          %2696 = vmatprep.subr.mxu0 0.0
          %2697 = vmatpush1.msra.mxu0 %v2463
          %2698 = vmatprep.subr.mxu0 0.0
          %2699 = vmatpush1.msra.mxu0 %v2462
          %2700 = vmatprep.subr.mxu0 0.0
          %2701 = vmatpush1.msra.mxu0 %v2461
          %2702 = vmatprep.subr.mxu0 0.0
          %2703 = vmatpush1.msra.mxu0 %v2460
          %2704 = vmatprep.subr.mxu0 0.0
          %2705 = vmatpush1.msra.mxu0 %v2459
          %2706 = vmatprep.subr.mxu0 0.0
          %2707 = vmatpush1.msra.mxu0 %v2458
          %2708 = vmatprep.subr.mxu0 0.0
          %2709 = vmatpush2.msra.mxu0 %v2489
          %2710 = vmatprep.subr.mxu0 0.0
          %2711 = vmatpush2.msra.mxu0 %v2488
          %2712 = vmatprep.subr.mxu0 0.0
          %2713 = vmatpush2.msra.mxu0 %v2487
          %2714 = vmatprep.subr.mxu0 0.0
          %2715 = vmatpush2.msra.mxu0 %v2486
          %2716 = vmatprep.subr.mxu0 0.0
          %2717 = vmatpush2.msra.mxu0 %v2485
          %2718 = vmatprep.subr.mxu0 0.0
          %2719 = vmatpush2.msra.mxu0 %v2484
          %2720 = vmatprep.subr.mxu0 0.0
          %2721 = vmatpush2.msra.mxu0 %v2483
          %2722 = vmatprep.subr.mxu0 0.0
          %2723 = vmatpush2.msra.mxu0 %v2482
          %2724 = vmatprep.subr.mxu0 0.0
          %2725 = vmatpush2.msra.mxu0 %v2481
          %2726 = vmatprep.subr.mxu0 0.0
          %2727 = vmatpush2.msra.mxu0 %v2480
          %2728 = vmatprep.subr.mxu0 0.0
          %2729 = vmatpush2.msra.mxu0 %v2479
          %2730 = vmatprep.subr.mxu0 0.0
          %2731 = vmatpush2.msra.mxu0 %v2478
          %2732 = vmatprep.subr.mxu0 0.0
          %2733 = vmatpush2.msra.mxu0 %v2477
          %2734 = vmatprep.subr.mxu0 0.0
          %2735 = vmatpush2.msra.mxu0 %v2476
          %2736 = vmatprep.subr.mxu0 0.0
          %2737 = vmatpush2.msra.mxu0 %v2475
          %2738 = vmatprep.subr.mxu0 0.0
          %2739 = vmatpush2.msra.mxu0 %v2474
          %2740 = vmatprep.mubr.f32.mxu0 %v2391
          %2741 = vmatmul.mubr.f32.gmra.mxu0 %v2390
          %v2742 = vpop.f32.mrf.mxu0
          %v2743 = vadd.f32 %v2673, %v2742
          %v2744 = vpop.f32.mrf.mxu0
          %2745 = vdwg.mxu0
          %2746 = vmatprep.subr.mxu0 0.0
          %2747 = vmatpush1.msra.mxu0 %v2505
          %2748 = vmatprep.subr.mxu0 0.0
          %2749 = vmatpush1.msra.mxu0 %v2504
          %2750 = vmatprep.subr.mxu0 0.0
          %2751 = vmatpush1.msra.mxu0 %v2503
          %2752 = vmatprep.subr.mxu0 0.0
          %2753 = vmatpush1.msra.mxu0 %v2502
          %2754 = vmatprep.subr.mxu0 0.0
          %2755 = vmatpush1.msra.mxu0 %v2501
          %2756 = vmatprep.subr.mxu0 0.0
          %2757 = vmatpush1.msra.mxu0 %v2500
          %2758 = vmatprep.subr.mxu0 0.0
          %2759 = vmatpush1.msra.mxu0 %v2499
          %2760 = vmatprep.subr.mxu0 0.0
          %2761 = vmatpush1.msra.mxu0 %v2498
          %2762 = vmatprep.subr.mxu0 0.0
          %2763 = vmatpush1.msra.mxu0 %v2497
          %2764 = vmatprep.subr.mxu0 0.0
          %2765 = vmatpush1.msra.mxu0 %v2496
          %2766 = vmatprep.subr.mxu0 0.0
          %2767 = vmatpush1.msra.mxu0 %v2495
          %2768 = vmatprep.subr.mxu0 0.0
          %2769 = vmatpush1.msra.mxu0 %v2494
          %2770 = vmatprep.subr.mxu0 0.0
          %2771 = vmatpush1.msra.mxu0 %v2493
          %2772 = vmatprep.subr.mxu0 0.0
          %2773 = vmatpush1.msra.mxu0 %v2492
          %2774 = vmatprep.subr.mxu0 0.0
          %2775 = vmatpush1.msra.mxu0 %v2491
          %2776 = vmatprep.subr.mxu0 0.0
          %2777 = vmatpush1.msra.mxu0 %v2490
          %2778 = vmatprep.subr.mxu0 0.0
          %2779 = vmatpush2.msra.mxu0 %v2521
          %2780 = vmatprep.subr.mxu0 0.0
          %2781 = vmatpush2.msra.mxu0 %v2520
          %2782 = vmatprep.subr.mxu0 0.0
          %2783 = vmatpush2.msra.mxu0 %v2519
          %2784 = vmatprep.subr.mxu0 0.0
          %2785 = vmatpush2.msra.mxu0 %v2518
          %2786 = vmatprep.subr.mxu0 0.0
          %2787 = vmatpush2.msra.mxu0 %v2517
          %2788 = vmatprep.subr.mxu0 0.0
          %2789 = vmatpush2.msra.mxu0 %v2516
          %2790 = vmatprep.subr.mxu0 0.0
          %2791 = vmatpush2.msra.mxu0 %v2515
          %2792 = vmatprep.subr.mxu0 0.0
          %2793 = vmatpush2.msra.mxu0 %v2514
          %2794 = vmatprep.subr.mxu0 0.0
          %2795 = vmatpush2.msra.mxu0 %v2513
          %2796 = vmatprep.subr.mxu0 0.0
          %2797 = vmatpush2.msra.mxu0 %v2512
          %2798 = vmatprep.subr.mxu0 0.0
          %2799 = vmatpush2.msra.mxu0 %v2511
          %2800 = vmatprep.subr.mxu0 0.0
          %2801 = vmatpush2.msra.mxu0 %v2510
          %2802 = vmatprep.subr.mxu0 0.0
          %2803 = vmatpush2.msra.mxu0 %v2509
          %2804 = vmatprep.subr.mxu0 0.0
          %2805 = vmatpush2.msra.mxu0 %v2508
          %2806 = vmatprep.subr.mxu0 0.0
          %2807 = vmatpush2.msra.mxu0 %v2507
          %2808 = vmatprep.subr.mxu0 0.0
          %2809 = vmatpush2.msra.mxu0 %v2506
          %2810 = vmatprep.mubr.f32.mxu0 %v2393
          %2811 = vmatmul.mubr.f32.gmra.mxu0 %v2392
          %v2812 = vpop.f32.mrf.mxu0
          %v2813 = vadd.f32 %v2743, %v2812
          %v2814 = vpop.f32.mrf.mxu0
          %2815 = vdwg.mxu0
          %v2816 = vld [vmem:[#allocation12] sm:$0x1]
          %v2818 = vlaneseq
          %v2819 = vshrl.u32 %v2818, 7
          %v2820 = vsub.s32 0, %v2819
          %v2821 = vrot.slane %v2816, %v2820
          %v2823 = vadd.f32 %v2813, %v2821
          %2824 = vst [vmem:[#allocation14] sm:$0xff] %v2823
        $region80: #{tpu_custom_call.1} parent=47 // pred_fallthru
          _
        // Predicated region
        $region81: #{tpu_custom_call.1} parent=47 // pred_check
          %p2825 = pneg %p221
        $region82: #{tpu_custom_call.1} parent=47 // pred_check_branch
          %2827 = sbr.rel (%p2825) target = $region84
        $region83: #{tpu_custom_call.1} parent=47 // pred_region
          %s2829 = ssub.s32 128, 128
          %2830 = vsyncadd [#allocation5], %s2829
          %s2831 = smul.addr %s31, 128
          %s2832 = scalar_lea.hbm %s7, %s2831
          %s2834 = sshll.u32 [#allocation14], 4
          %s2835 = int_to_ptr.vmem [resolvable:$true] %s2834
          %2837 = dma.vmem_to_hbm [thread:$0]  %s2835, 128, %s2832, [#allocation5]
        $region84: #{tpu_custom_call.1} parent=47 // pred_fallthru
          _
        // Predicated region
        $region85: #{tpu_custom_call.1} parent=47 // pred_check
          %p2838 = pneg %p221
        $region86: #{tpu_custom_call.1} parent=47 // pred_check_branch
          %2840 = sbr.rel (%p2838) target = $region88
        $region87: #{tpu_custom_call.1} parent=47 // pred_region
          %2841 = dma.done [#allocation5], 128
        $region88: #{tpu_custom_call.1} parent=47 // pred_fallthru
          _
      $region48: #{tpu_custom_call.1} parent=5 // pred_fallthru
        _
      %p2842 = scmp.le.s32.totalorder 2, %s22
      // Predicated region
      $region89: #{tpu_custom_call.1} parent=5 // pred_check
        %p2843 = pneg %p2842
      $region90: #{tpu_custom_call.1} parent=5 // pred_check_branch
        %2845 = sbr.rel (%p2843) target = $region92
      $region91: #{tpu_custom_call.1} parent=5 // pred_region
        %s2846 = ssub.s32 %s22, 2
      $region92: #{tpu_custom_call.1} parent=5 // pred_fallthru
        _
    $region6: #{tpu_custom_call.1} parent=1 // loop_footer
      %s26 = sadd.s32 1, %s22
    $region7: #{tpu_custom_call.1} parent=1 // loop_footer_branch
      %21 = sbr.rel target = $region3
    $region8: #{tpu_custom_call.1} parent=1 // loop_exit
      _
    %2847 = vsyncpa [#allocation4], 1
    %s2848 = scalar_lea.sflag [#allocation4], 1
    %2849 = vsyncpa %s2848, 1
    %2850 = vsyncpa [#allocation7], 1
    %s2851 = scalar_lea.sflag [#allocation7], 1
    %2852 = vsyncpa %s2851, 1
    %2853 = vsyncpa [#allocation10], 1
    %2854 = vsyncpa [#allocation13], 1
    %2855 = vsyncpa [#allocation5], 1
    %s2856 = scalar_lea.sflag [#allocation5], 1
    %2857 = vsyncpa %s2856, 1

</llo_original>
